<compile_context>
chip_gen: v7x
topology: tpu7x:2x2x1
jax: 0.10.0
libtpu: 0.0.40
codegen_flags: <defaults>
</compile_context>

<pallas_src>
import jax
import jax.numpy as jnp
from jax.experimental import pallas as pl
from jax.experimental.pallas import tpu as pltpu

EPS = 1e-5


# ------------------------------ fused kernel -------------------------------- #

def _pad1_hw(a, dtype):
    """Zero-pad an (H, W, C) value by 1 on both spatial dims, in-kernel."""
    h, w, c = a.shape
    a = a.astype(dtype)
    zc = jnp.zeros((h, 1, c), dtype)
    zr = jnp.zeros((1, w + 2, c), dtype)
    a = jnp.concatenate([zc, a, zc], axis=1)          # (H, W+2, C)
    return jnp.concatenate([zr, a, zr], axis=0)       # (H+2, W+2, C)


def _make_block_kernel(H, W, Cin, Cout, stride, equal):
    # output spatial dims for k=3, pad=1, stride=s
    H1 = (H - 1) // stride + 1
    W1 = (W - 1) // stride + 1
    M = H1 * W1
    n_in = 7 if equal else 8

    def kernel(*refs):
        x_ref, s1_ref, b1_ref, w1_ref, s2_ref, b2_ref, w2_ref = refs[:7]
        wsc_ref = None if equal else refs[7]
        o_ref = refs[n_in]
        ap_ref = refs[n_in + 1] if stride > 1 else None   # padded-a1 scratch

        # ---- bn1 + relu (elementwise stays f32; only MXU inputs go bf16) ----
        x = x_ref[0]                                       # (H, W, Cin) f32
        s1 = s1_ref[...].reshape(1, 1, Cin)
        b1 = b1_ref[...].reshape(1, 1, Cin)
        a1 = jnp.maximum(x * s1 + b1, 0.0)                 # (H, W, Cin) f32

        # ---- conv1: 3x3, stride=s, pad=1  (im2col, one K=9*Cin MXU matmul) --
        a1p = _pad1_hw(a1, jnp.bfloat16)                   # (H+2, W+2, Cin)
        if stride > 1:
            ap_ref[...] = a1p                              # aligned full store
            def tap1(kh, kw):                              # strided tap read
                return ap_ref[pl.ds(kh, H1, stride), pl.ds(kw, W1, stride), :]
        else:
            def tap1(kh, kw):                              # plain value slice
                return a1p[kh:kh + H1, kw:kw + W1, :]
        patches = jnp.concatenate(
            [tap1(kh, kw).reshape(M, Cin) for kh in range(3) for kw in range(3)],
            axis=-1)                                       # (M, 9*Cin) bf16
        c1 = jnp.dot(patches, w1_ref[...],
                     preferred_element_type=jnp.float32)   # (M, Cout) f32

        # ---- bn2 + relu ----
        a2 = jnp.maximum(c1 * s2_ref[...] + b2_ref[...], 0.0)
        # TODO(synk): F.dropout would go here for droprate > 0 (unimplemented).

        # ---- conv2: 3x3, stride=1, pad=1 (im2col, one K=9*Cout matmul) ------
        a2p = _pad1_hw(a2.reshape(H1, W1, Cout), jnp.bfloat16)
        patches2 = jnp.concatenate(
            [a2p[kh:kh + H1, kw:kw + W1, :].reshape(M, Cout)
             for kh in range(3) for kw in range(3)],
            axis=-1)                                       # (M, 9*Cout) bf16
        c2 = jnp.dot(patches2, w2_ref[...],
                     preferred_element_type=jnp.float32)   # (M, Cout) f32

        # ---- shortcut + residual add in the epilogue (single HBM store) -----
        if equal:
            res = x.reshape(M, Cout)                       # identity shortcut
        else:
            if stride > 1:
                a1s = ap_ref[pl.ds(1, H1, stride), pl.ds(1, W1, stride), :]
            else:
                a1s = a1p[1:1 + H1, 1:1 + W1, :]
            res = jnp.dot(a1s.reshape(M, Cin), wsc_ref[...],
                          preferred_element_type=jnp.float32)
        y = res + c2
        o_ref[...] = y.reshape(1, H1, W1, Cout).astype(o_ref.dtype)

    return kernel, H1, W1


# --------------------------------- wrapper ----------------------------------- #

def basic_block_forward(x_nchw, p, in_planes, out_planes, stride, drop_rate=0.0):
    assert drop_rate == 0.0  # TODO(synk): dropout not implemented
    equal = in_planes == out_planes
    # PyTorch module adds x (unstrided) when equalInOut -> only valid for stride 1.
    assert (not equal) or stride == 1, "identity shortcut requires stride == 1"

    n, _, H, W = x_nchw.shape
    x = jnp.transpose(x_nchw, (0, 2, 3, 1))               # NCHW -> NHWC (lane=C)

    # Fold BN (running stats) into scale/shift at trace time.
    s1 = p["bn1_gamma"] / jnp.sqrt(p["bn1_var"] + EPS)
    b1 = p["bn1_beta"] - p["bn1_mean"] * s1
    s2 = p["bn2_gamma"] / jnp.sqrt(p["bn2_var"] + EPS)
    b2 = p["bn2_beta"] - p["bn2_mean"] * s2

    # im2col weight layout: rows ordered (kh, kw, cin); bf16 for the MXU.
    w1 = p["conv1_w"].reshape(9 * in_planes, out_planes).astype(jnp.bfloat16)
    w2 = p["conv2_w"].reshape(9 * out_planes, out_planes).astype(jnp.bfloat16)

    kernel, H1, W1 = _make_block_kernel(H, W, in_planes, out_planes, stride, equal)

    in_arrays = [x,
                 s1.reshape(1, in_planes), b1.reshape(1, in_planes), w1,
                 s2.reshape(1, out_planes), b2.reshape(1, out_planes), w2]
    in_specs = [
        pl.BlockSpec((1, H, W, in_planes), lambda i: (i, 0, 0, 0)),
        pl.BlockSpec((1, in_planes), lambda i: (0, 0)),
        pl.BlockSpec((1, in_planes), lambda i: (0, 0)),
        pl.BlockSpec((9 * in_planes, out_planes), lambda i: (0, 0)),
        pl.BlockSpec((1, out_planes), lambda i: (0, 0)),
        pl.BlockSpec((1, out_planes), lambda i: (0, 0)),
        pl.BlockSpec((9 * out_planes, out_planes), lambda i: (0, 0)),
    ]
    if not equal:
        in_arrays.append(p["short_w"].astype(jnp.bfloat16))
        in_specs.append(pl.BlockSpec((in_planes, out_planes), lambda i: (0, 0)))

    scratch = []
    if stride > 1:
        # padded relu(bn1(x)) tile, read back with strided taps
        scratch.append(pltpu.VMEM((H + 2, W + 2, in_planes), jnp.bfloat16))

    y = pl.pallas_call(
        kernel,
        out_shape=jax.ShapeDtypeStruct((n, H1, W1, out_planes), x.dtype),
        grid=(n,),
        in_specs=in_specs,
        out_specs=pl.BlockSpec((1, H1, W1, out_planes), lambda i: (i, 0, 0, 0)),
        scratch_shapes=scratch,
        compiler_params=pltpu.CompilerParams(
            dimension_semantics=("parallel",)),   # v7x: two TCs split the batch
    )(*in_arrays)

    return jnp.transpose(y, (0, 3, 1, 2))                 # NHWC -> NCHW


# --------------------------- parameter construction -------------------------- #

def init_params(key, in_planes, out_planes):
    ks = jax.random.split(key, 11)
    f32 = jnp.float32
    p = {
        "bn1_gamma": jax.random.uniform(ks[0], (in_planes,), f32, 0.5, 1.5),
        "bn1_beta":  0.1 * jax.random.normal(ks[1], (in_planes,), f32),
        "bn1_mean":  0.1 * jax.random.normal(ks[2], (in_planes,), f32),
        "bn1_var":   jax.random.uniform(ks[3], (in_planes,), f32, 0.5, 1.5),
        "conv1_w":   jax.random.normal(ks[4], (3, 3, in_planes, out_planes), f32)
                     * (2.0 / (9 * out_planes)) ** 0.5,
        "bn2_gamma": jax.random.uniform(ks[5], (out_planes,), f32, 0.5, 1.5),
        "bn2_beta":  0.1 * jax.random.normal(ks[6], (out_planes,), f32),
        "bn2_mean":  0.1 * jax.random.normal(ks[7], (out_planes,), f32),
        "bn2_var":   jax.random.uniform(ks[8], (out_planes,), f32, 0.5, 1.5),
        "conv2_w":   jax.random.normal(ks[9], (3, 3, out_planes, out_planes), f32)
                     * (2.0 / (9 * out_planes)) ** 0.5,
    }
    if in_planes != out_planes:
        p["short_w"] = jax.random.normal(ks[10], (in_planes, out_planes), f32) \
                       * (2.0 / out_planes) ** 0.5
    return p


# ------------------------------ pure-JAX reference --------------------------- #

def ref_forward(x_nchw, p, in_planes, out_planes, stride):
    dn = ("NHWC", "HWIO", "NHWC")
    hp = jax.lax.Precision.HIGHEST
    x = jnp.transpose(x_nchw, (0, 2, 3, 1))

    def bnr(v, g, b, m, var):
        return jnp.maximum((v - m) / jnp.sqrt(var + EPS) * g + b, 0.0)

    a1 = bnr(x, p["bn1_gamma"], p["bn1_beta"], p["bn1_mean"], p["bn1_var"])
    out = jax.lax.conv_general_dilated(a1, p["conv1_w"], (stride, stride),
                                       ((1, 1), (1, 1)), dimension_numbers=dn,
                                       precision=hp)
    out = bnr(out, p["bn2_gamma"], p["bn2_beta"], p["bn2_mean"], p["bn2_var"])
    out = jax.lax.conv_general_dilated(out, p["conv2_w"], (1, 1),
                                       ((1, 1), (1, 1)), dimension_numbers=dn,
                                       precision=hp)
    if in_planes == out_planes:
        res = x
    else:
        w = p["short_w"].reshape(1, 1, in_planes, out_planes)
        res = jax.lax.conv_general_dilated(a1, w, (stride, stride),
                                           ((0, 0), (0, 0)), dimension_numbers=dn,
                                           precision=hp)
    return jnp.transpose(res + out, (0, 3, 1, 2))


# ----------------------------------- main ------------------------------------ #

if __name__ == "__main__":
    key = jax.random.PRNGKey(0)
    kx1, kx2, kp1, kp2 = jax.random.split(key, 4)

    # Pallas kernel uses bf16 MXU inputs (f32 accumulation) per perf guidance,
    # so compare against the f32 reference with a correspondingly loose but
    # bug-catching tolerance.
    ATOL = RTOL = 3e-2

    # Config A: equalInOut path (identity shortcut): in=out=16, stride=1
    inA, outA, sA = 16, 16, 1
    xA = jax.random.normal(kx1, (2, inA, 16, 16), jnp.float32)    # NCHW input
    pA = init_params(kp1, inA, outA)
    yA = basic_block_forward(xA, pA, inA, outA, sA)
    jax.block_until_ready(yA)
    assert yA.shape == (2, outA, 16, 16)
    assert jnp.allclose(yA, ref_forward(xA, pA, inA, outA, sA), atol=ATOL, rtol=RTOL)

    # Config B: downsample path (1x1 conv shortcut): in=16, out=32, stride=2
    inB, outB, sB = 16, 32, 2
    xB = jax.random.normal(kx2, (2, inB, 16, 16), jnp.float32)    # NCHW input
    pB = init_params(kp2, inB, outB)
    yB = basic_block_forward(xB, pB, inB, outB, sB)
    jax.block_until_ready(yB)
    assert yB.shape == (2, outB, 8, 8)
    assert jnp.allclose(yB, ref_forward(xB, pB, inB, outB, sB), atol=ATOL, rtol=RTOL)

    print("KERNEL_OK")
</pallas_src>

<mosaic_0001>
module attributes {stable_mosaic.version = 11 : i64} {
  func.func @kernel(%arg0: i32, %arg1: memref<1x16x16x16xf32, #tpu.memory_space<vmem>>, %arg2: memref<1x16xf32, #tpu.memory_space<vmem>>, %arg3: memref<1x16xf32, #tpu.memory_space<vmem>>, %arg4: memref<144x16xbf16, #tpu.memory_space<vmem>>, %arg5: memref<1x16xf32, #tpu.memory_space<vmem>>, %arg6: memref<1x16xf32, #tpu.memory_space<vmem>>, %arg7: memref<144x16xbf16, #tpu.memory_space<vmem>>, %arg8: memref<1x16x16x16xf32, #tpu.memory_space<vmem>>) attributes {dimension_semantics = [#tpu.dimension_semantics<parallel>], iteration_bounds = array<i64: 2>, scalar_prefetch = 0 : i64, scratch_operands = 0 : i64, tpu.core_type = #tpu.core_type<tc>, window_params = [{transform_indices = @transform_0, window_bounds = array<i64: 1, 16, 16, 16>}, {pipeline_mode = #tpu.pipeline_mode<synchronous>, transform_indices = @transform_1, window_bounds = array<i64: 1, 16>}, {pipeline_mode = #tpu.pipeline_mode<synchronous>, transform_indices = @transform_2, window_bounds = array<i64: 1, 16>}, {pipeline_mode = #tpu.pipeline_mode<synchronous>, transform_indices = @transform_3, window_bounds = array<i64: 144, 16>}, {pipeline_mode = #tpu.pipeline_mode<synchronous>, transform_indices = @transform_4, window_bounds = array<i64: 1, 16>}, {pipeline_mode = #tpu.pipeline_mode<synchronous>, transform_indices = @transform_5, window_bounds = array<i64: 1, 16>}, {pipeline_mode = #tpu.pipeline_mode<synchronous>, transform_indices = @transform_6, window_bounds = array<i64: 144, 16>}, {transform_indices = @transform_7, window_bounds = array<i64: 1, 16, 16, 16>}]} {
    %c0 = arith.constant 0 : index
    %c0_0 = arith.constant 0 : index
    %c0_1 = arith.constant 0 : index
    %c0_2 = arith.constant 0 : index
    %0 = vector.load %arg1[%c0, %c0_0, %c0_1, %c0_2] : memref<1x16x16x16xf32, #tpu.memory_space<vmem>>, vector<1x16x16x16xf32>
    %1 = vector.shape_cast %0 : vector<1x16x16x16xf32> to vector<16x16x16xf32>
    %c0_3 = arith.constant 0 : index
    %c0_4 = arith.constant 0 : index
    %2 = vector.load %arg2[%c0_3, %c0_4] : memref<1x16xf32, #tpu.memory_space<vmem>>, vector<1x16xf32>
    %3 = vector.shape_cast %2 : vector<1x16xf32> to vector<1x1x16xf32>
    %c0_5 = arith.constant 0 : index
    %c0_6 = arith.constant 0 : index
    %4 = vector.load %arg3[%c0_5, %c0_6] : memref<1x16xf32, #tpu.memory_space<vmem>>, vector<1x16xf32>
    %5 = vector.shape_cast %4 : vector<1x16xf32> to vector<1x1x16xf32>
    %6 = vector.broadcast %3 : vector<1x1x16xf32> to vector<16x16x16xf32>
    %7 = arith.mulf %1, %6 : vector<16x16x16xf32>
    %8 = vector.broadcast %5 : vector<1x1x16xf32> to vector<16x16x16xf32>
    %9 = arith.addf %7, %8 : vector<16x16x16xf32>
    %cst = arith.constant 0.000000e+00 : f32
    %10 = vector.broadcast %cst : f32 to vector<16x16x16xf32>
    %11 = arith.maximumf %9, %10 : vector<16x16x16xf32>
    %12 = arith.truncf %11 : vector<16x16x16xf32> to vector<16x16x16xbf16>
    %cst_7 = arith.constant 0.000000e+00 : bf16
    %13 = vector.broadcast %cst_7 : bf16 to vector<16x1x16xbf16>
    %cst_8 = arith.constant 0.000000e+00 : bf16
    %14 = vector.broadcast %cst_8 : bf16 to vector<1x18x16xbf16>
    %15 = tpu.concatenate %13, %12, %13 in 1 : vector<16x1x16xbf16>, vector<16x16x16xbf16>, vector<16x1x16xbf16> -> vector<16x18x16xbf16>
    %16 = tpu.concatenate %14, %15, %14 in 0 : vector<1x18x16xbf16>, vector<16x18x16xbf16>, vector<1x18x16xbf16> -> vector<18x18x16xbf16>
    %17 = vector.extract_strided_slice %16 {offsets = [0, 0, 0], sizes = [16, 16, 16], strides = [1, 1, 1]} : vector<18x18x16xbf16> to vector<16x16x16xbf16>
    %18 = vector.shape_cast %17 : vector<16x16x16xbf16> to vector<256x16xbf16>
    %19 = vector.extract_strided_slice %16 {offsets = [0, 1, 0], sizes = [16, 16, 16], strides = [1, 1, 1]} : vector<18x18x16xbf16> to vector<16x16x16xbf16>
    %20 = vector.shape_cast %19 : vector<16x16x16xbf16> to vector<256x16xbf16>
    %21 = vector.extract_strided_slice %16 {offsets = [0, 2, 0], sizes = [16, 16, 16], strides = [1, 1, 1]} : vector<18x18x16xbf16> to vector<16x16x16xbf16>
    %22 = vector.shape_cast %21 : vector<16x16x16xbf16> to vector<256x16xbf16>
    %23 = vector.extract_strided_slice %16 {offsets = [1, 0, 0], sizes = [16, 16, 16], strides = [1, 1, 1]} : vector<18x18x16xbf16> to vector<16x16x16xbf16>
    %24 = vector.shape_cast %23 : vector<16x16x16xbf16> to vector<256x16xbf16>
    %25 = vector.extract_strided_slice %16 {offsets = [1, 1, 0], sizes = [16, 16, 16], strides = [1, 1, 1]} : vector<18x18x16xbf16> to vector<16x16x16xbf16>
    %26 = vector.shape_cast %25 : vector<16x16x16xbf16> to vector<256x16xbf16>
    %27 = vector.extract_strided_slice %16 {offsets = [1, 2, 0], sizes = [16, 16, 16], strides = [1, 1, 1]} : vector<18x18x16xbf16> to vector<16x16x16xbf16>
    %28 = vector.shape_cast %27 : vector<16x16x16xbf16> to vector<256x16xbf16>
    %29 = vector.extract_strided_slice %16 {offsets = [2, 0, 0], sizes = [16, 16, 16], strides = [1, 1, 1]} : vector<18x18x16xbf16> to vector<16x16x16xbf16>
    %30 = vector.shape_cast %29 : vector<16x16x16xbf16> to vector<256x16xbf16>
    %31 = vector.extract_strided_slice %16 {offsets = [2, 1, 0], sizes = [16, 16, 16], strides = [1, 1, 1]} : vector<18x18x16xbf16> to vector<16x16x16xbf16>
    %32 = vector.shape_cast %31 : vector<16x16x16xbf16> to vector<256x16xbf16>
    %33 = vector.extract_strided_slice %16 {offsets = [2, 2, 0], sizes = [16, 16, 16], strides = [1, 1, 1]} : vector<18x18x16xbf16> to vector<16x16x16xbf16>
    %34 = vector.shape_cast %33 : vector<16x16x16xbf16> to vector<256x16xbf16>
    %35 = tpu.concatenate %18, %20, %22, %24, %26, %28, %30, %32, %34 in 1 : vector<256x16xbf16>, vector<256x16xbf16>, vector<256x16xbf16>, vector<256x16xbf16>, vector<256x16xbf16>, vector<256x16xbf16>, vector<256x16xbf16>, vector<256x16xbf16>, vector<256x16xbf16> -> vector<256x144xbf16>
    %c0_9 = arith.constant 0 : index
    %c0_10 = arith.constant 0 : index
    %36 = vector.load %arg4[%c0_9, %c0_10] : memref<144x16xbf16, #tpu.memory_space<vmem>>, vector<144x16xbf16>
    %cst_11 = arith.constant dense<0.000000e+00> : vector<256x16xf32>
    %37 = tpu.matmul %35, %36, %cst_11 {dimension_numbers = #tpu.dot_dimension_numbers<[1], [0], [0], [1], [0, 0, 1, 1], [], []>} : vector<256x144xbf16>, vector<144x16xbf16>, vector<256x16xf32> -> vector<256x16xf32>
    %c0_12 = arith.constant 0 : index
    %c0_13 = arith.constant 0 : index
    %38 = vector.load %arg5[%c0_12, %c0_13] : memref<1x16xf32, #tpu.memory_space<vmem>>, vector<1x16xf32>
    %39 = vector.broadcast %38 : vector<1x16xf32> to vector<256x16xf32>
    %40 = arith.mulf %37, %39 : vector<256x16xf32>
    %c0_14 = arith.constant 0 : index
    %c0_15 = arith.constant 0 : index
    %41 = vector.load %arg6[%c0_14, %c0_15] : memref<1x16xf32, #tpu.memory_space<vmem>>, vector<1x16xf32>
    %42 = vector.broadcast %41 : vector<1x16xf32> to vector<256x16xf32>
    %43 = arith.addf %40, %42 : vector<256x16xf32>
    %cst_16 = arith.constant 0.000000e+00 : f32
    %44 = vector.broadcast %cst_16 : f32 to vector<256x16xf32>
    %45 = arith.maximumf %43, %44 : vector<256x16xf32>
    %46 = vector.shape_cast %45 : vector<256x16xf32> to vector<16x16x16xf32>
    %47 = arith.truncf %46 : vector<16x16x16xf32> to vector<16x16x16xbf16>
    %cst_17 = arith.constant 0.000000e+00 : bf16
    %48 = vector.broadcast %cst_17 : bf16 to vector<16x1x16xbf16>
    %cst_18 = arith.constant 0.000000e+00 : bf16
    %49 = vector.broadcast %cst_18 : bf16 to vector<1x18x16xbf16>
    %50 = tpu.concatenate %48, %47, %48 in 1 : vector<16x1x16xbf16>, vector<16x16x16xbf16>, vector<16x1x16xbf16> -> vector<16x18x16xbf16>
    %51 = tpu.concatenate %49, %50, %49 in 0 : vector<1x18x16xbf16>, vector<16x18x16xbf16>, vector<1x18x16xbf16> -> vector<18x18x16xbf16>
    %52 = vector.extract_strided_slice %51 {offsets = [0, 0, 0], sizes = [16, 16, 16], strides = [1, 1, 1]} : vector<18x18x16xbf16> to vector<16x16x16xbf16>
    %53 = vector.shape_cast %52 : vector<16x16x16xbf16> to vector<256x16xbf16>
    %54 = vector.extract_strided_slice %51 {offsets = [0, 1, 0], sizes = [16, 16, 16], strides = [1, 1, 1]} : vector<18x18x16xbf16> to vector<16x16x16xbf16>
    %55 = vector.shape_cast %54 : vector<16x16x16xbf16> to vector<256x16xbf16>
    %56 = vector.extract_strided_slice %51 {offsets = [0, 2, 0], sizes = [16, 16, 16], strides = [1, 1, 1]} : vector<18x18x16xbf16> to vector<16x16x16xbf16>
    %57 = vector.shape_cast %56 : vector<16x16x16xbf16> to vector<256x16xbf16>
    %58 = vector.extract_strided_slice %51 {offsets = [1, 0, 0], sizes = [16, 16, 16], strides = [1, 1, 1]} : vector<18x18x16xbf16> to vector<16x16x16xbf16>
    %59 = vector.shape_cast %58 : vector<16x16x16xbf16> to vector<256x16xbf16>
    %60 = vector.extract_strided_slice %51 {offsets = [1, 1, 0], sizes = [16, 16, 16], strides = [1, 1, 1]} : vector<18x18x16xbf16> to vector<16x16x16xbf16>
    %61 = vector.shape_cast %60 : vector<16x16x16xbf16> to vector<256x16xbf16>
    %62 = vector.extract_strided_slice %51 {offsets = [1, 2, 0], sizes = [16, 16, 16], strides = [1, 1, 1]} : vector<18x18x16xbf16> to vector<16x16x16xbf16>
    %63 = vector.shape_cast %62 : vector<16x16x16xbf16> to vector<256x16xbf16>
    %64 = vector.extract_strided_slice %51 {offsets = [2, 0, 0], sizes = [16, 16, 16], strides = [1, 1, 1]} : vector<18x18x16xbf16> to vector<16x16x16xbf16>
    %65 = vector.shape_cast %64 : vector<16x16x16xbf16> to vector<256x16xbf16>
    %66 = vector.extract_strided_slice %51 {offsets = [2, 1, 0], sizes = [16, 16, 16], strides = [1, 1, 1]} : vector<18x18x16xbf16> to vector<16x16x16xbf16>
    %67 = vector.shape_cast %66 : vector<16x16x16xbf16> to vector<256x16xbf16>
    %68 = vector.extract_strided_slice %51 {offsets = [2, 2, 0], sizes = [16, 16, 16], strides = [1, 1, 1]} : vector<18x18x16xbf16> to vector<16x16x16xbf16>
    %69 = vector.shape_cast %68 : vector<16x16x16xbf16> to vector<256x16xbf16>
    %70 = tpu.concatenate %53, %55, %57, %59, %61, %63, %65, %67, %69 in 1 : vector<256x16xbf16>, vector<256x16xbf16>, vector<256x16xbf16>, vector<256x16xbf16>, vector<256x16xbf16>, vector<256x16xbf16>, vector<256x16xbf16>, vector<256x16xbf16>, vector<256x16xbf16> -> vector<256x144xbf16>
    %c0_19 = arith.constant 0 : index
    %c0_20 = arith.constant 0 : index
    %71 = vector.load %arg7[%c0_19, %c0_20] : memref<144x16xbf16, #tpu.memory_space<vmem>>, vector<144x16xbf16>
    %cst_21 = arith.constant dense<0.000000e+00> : vector<256x16xf32>
    %72 = tpu.matmul %70, %71, %cst_21 {dimension_numbers = #tpu.dot_dimension_numbers<[1], [0], [0], [1], [0, 0, 1, 1], [], []>} : vector<256x144xbf16>, vector<144x16xbf16>, vector<256x16xf32> -> vector<256x16xf32>
    %73 = vector.shape_cast %1 : vector<16x16x16xf32> to vector<256x16xf32>
    %74 = arith.addf %73, %72 : vector<256x16xf32>
    %75 = vector.shape_cast %74 : vector<256x16xf32> to vector<1x16x16x16xf32>
    %c0_22 = arith.constant 0 : index
    %c0_23 = arith.constant 0 : index
    %c0_24 = arith.constant 0 : index
    %c0_25 = arith.constant 0 : index
    %76 = vector.load %arg8[%c0_22, %c0_23, %c0_24, %c0_25] : memref<1x16x16x16xf32, #tpu.memory_space<vmem>>, vector<1x16x16x16xf32>
    tpu.vector_store %arg8[%c0_22, %c0_23, %c0_24, %c0_25], %75 {strides = array<i32>} : memref<1x16x16x16xf32, #tpu.memory_space<vmem>>, vector<1x16x16x16xf32>,
    return
  }
  func.func @transform_0(%arg0: i32) -> (i32, i32, i32, i32) {
    %c0_i32 = arith.constant 0 : i32
    %c0_i32_0 = arith.constant 0 : i32
    %c0_i32_1 = arith.constant 0 : i32
    %c0_i32_2 = arith.constant 0 : i32
    return %arg0, %c0_i32, %c0_i32_0, %c0_i32_1 : i32, i32, i32, i32
  }
  func.func @transform_1(%arg0: i32) -> (i32, i32) {
    %c0_i32 = arith.constant 0 : i32
    %c0_i32_0 = arith.constant 0 : i32
    %c0_i32_1 = arith.constant 0 : i32
    return %c0_i32, %c0_i32_0 : i32, i32
  }
  func.func @transform_2(%arg0: i32) -> (i32, i32) {
    %c0_i32 = arith.constant 0 : i32
    %c0_i32_0 = arith.constant 0 : i32
    %c0_i32_1 = arith.constant 0 : i32
    return %c0_i32, %c0_i32_0 : i32, i32
  }
  func.func @transform_3(%arg0: i32) -> (i32, i32) {
    %c0_i32 = arith.constant 0 : i32
    %c0_i32_0 = arith.constant 0 : i32
    %c0_i32_1 = arith.constant 0 : i32
    return %c0_i32, %c0_i32_0 : i32, i32
  }
  func.func @transform_4(%arg0: i32) -> (i32, i32) {
    %c0_i32 = arith.constant 0 : i32
    %c0_i32_0 = arith.constant 0 : i32
    %c0_i32_1 = arith.constant 0 : i32
    return %c0_i32, %c0_i32_0 : i32, i32
  }
  func.func @transform_5(%arg0: i32) -> (i32, i32) {
    %c0_i32 = arith.constant 0 : i32
    %c0_i32_0 = arith.constant 0 : i32
    %c0_i32_1 = arith.constant 0 : i32
    return %c0_i32, %c0_i32_0 : i32, i32
  }
  func.func @transform_6(%arg0: i32) -> (i32, i32) {
    %c0_i32 = arith.constant 0 : i32
    %c0_i32_0 = arith.constant 0 : i32
    %c0_i32_1 = arith.constant 0 : i32
    return %c0_i32, %c0_i32_0 : i32, i32
  }
  func.func @transform_7(%arg0: i32) -> (i32, i32, i32, i32) {
    %c0_i32 = arith.constant 0 : i32
    %c0_i32_0 = arith.constant 0 : i32
    %c0_i32_1 = arith.constant 0 : i32
    %c0_i32_2 = arith.constant 0 : i32
    return %arg0, %c0_i32, %c0_i32_0, %c0_i32_1 : i32, i32, i32, i32
  }
}

</mosaic_0001>

<llo_original>
// kernel: tpu_custom_call.1
$region0: #{tpu_custom_call.1}
  #allocation0 [shape = 'u32[]', space=smem, size = 0x4, offset = 0x4, fixed_abs, tag = 'smem constant byte address 0x4 - core index']
  #allocation1 [shape = 'u32[144,128]{1,0:T(1,128)}', space=vmem, size = 0x12000, scoped, tag = 'internal scratch']
  %s0 = inlined_call_operand.hbm [shape: f32[2,16,16,16], index: 0, kind: input, shape index: {}]
  %s1 = inlined_call_operand.vmem [shape: f32[1,16], index: 1, kind: input, shape index: {}]
  %s2 = inlined_call_operand.vmem [shape: f32[1,16], index: 2, kind: input, shape index: {}]
  %s3 = inlined_call_operand.vmem [shape: bf16[144,16], index: 3, kind: input, shape index: {}]
  %s4 = inlined_call_operand.vmem [shape: f32[1,16], index: 4, kind: input, shape index: {}]
  %s5 = inlined_call_operand.vmem [shape: f32[1,16], index: 5, kind: input, shape index: {}]
  %s6 = inlined_call_operand.vmem [shape: bf16[144,16], index: 6, kind: input, shape index: {}]
  %s7 = inlined_call_operand.hbm [shape: f32[2,16,16,16], index: 7, kind: output, shape index: {}]
  %s8 = sld [smem:[#allocation0]]
  $region65: #{tpu_custom_call.1} parent=0
    _
  %s10 = ssub.s32 1, %s8
  %s11 = scalar_select 0, %s10, %s8
  $region1: #{tpu_custom_call.1} parent=0
    #allocation2 [shape = 'u8[262144]{0}', space=vmem, size = 0x40000, scoped, tag = 'input window, operand 0']
    #allocation3 [shape = 's32[2]{0}', space=sflag, size = 0x8, scoped, tag = 'scoped memory for tpu_custom_call.1']
    #allocation4 [shape = 's32[2]{0}', space=sflag, size = 0x8, scoped, tag = 'scoped memory for tpu_custom_call.1']
    #allocation5 [shape = 'u8[262144]{0}', space=vmem, size = 0x40000, scoped, tag = 'output window, operand 0']
    %12 = vsyncpa [#allocation3], 0
    %s13 = scalar_lea.sflag [#allocation3], 1
    %14 = vsyncpa %s13, 0
    %15 = vsyncpa [#allocation4], 0
    %s16 = scalar_lea.sflag [#allocation4], 1
    %17 = vsyncpa %s16, 0
    loop: start=0, step=1, limit=4
    $region2: #{tpu_custom_call.1} parent=1 // loop_pre_header
      _
    $region3: #{tpu_custom_call.1} parent=1 // loop_header
      %s19 = sphi 0, %s23
      %p20 = scmp.ge.s32.totalorder %s19, 4
      %s29 = sphi 0, %s31
      %s32 = sphi 0, %s29
      %s33 = sphi 0, %s32
      %s49 = sphi 0, %s33
      %s53 = sphi 0, %s53
      %s55 = sphi 0, %s53
      %s56 = sphi 0, %s55
      %s70 = sphi 0, %s56
      %s74 = sphi 0, %s74
      %s76 = sphi 0, %s74
      %s77 = sphi 0, %s76
      %s91 = sphi 0, %s77
      %s95 = sphi 0, %s95
      %s97 = sphi 0, %s95
      %s98 = sphi 0, %s97
      %s112 = sphi 0, %s98
      %s116 = sphi 0, %s116
      %s118 = sphi 0, %s116
      %s119 = sphi 0, %s118
      %s133 = sphi 0, %s119
      %s137 = sphi 0, %s137
      %s139 = sphi 0, %s137
      %s140 = sphi 0, %s139
      %s154 = sphi 0, %s140
      %s158 = sphi 0, %s158
      %s160 = sphi 0, %s158
      %s161 = sphi 0, %s160
      %s175 = sphi 0, %s161
      %s181 = sphi 0, %s183
      %s184 = sphi 0, %s181
      %s185 = sphi 0, %s184
      %s201 = sphi 0, %s185
    $region4: #{tpu_custom_call.1} parent=1 // loop_header_branch
      %22 = sbr.rel (%p20) target = $region8
    $region5: #{tpu_custom_call.1} parent=1 // loop_body
      %s24 = ssub.s32 %s19, 1
      %s25 = ssub.s32 %s19, 2
      %s26 = sadd.s32 %s19, 1
      %s27 = ssub.s32 %s19, %s26
      %p28 = scmp.eq.s32.totalorder %s27, 0
      %s30 = sadd.s32 %s29, 1
      %s31 = scalar_select %p28, %s29, %s30
      %p34 = pneg %p28
      %p35 = scmp.eq.s32.totalorder %s19, 1
      %p36 = por %p34, %p35
      %p37 = scmp.ne.s32.totalorder %s29, %s32
      %p38 = scmp.eq.s32.totalorder %s19, 0
      %p39 = por %p37, %p38
      %p40 = scmp.ne.s32.totalorder %s29, %s32
      %p41 = scmp.eq.s32.totalorder %s24, 1
      %p42 = por %p40, %p41
      %p43 = scmp.ne.s32.totalorder %s32, %s33
      %p44 = scmp.eq.s32.totalorder %s24, 0
      %p45 = por %p43, %p44
      %p46 = scmp.ne.s32.totalorder %s32, %s33
      %p47 = scmp.eq.s32.totalorder %s25, 1
      %p48 = por %p46, %p47
      %p50 = scmp.ne.s32.totalorder %s33, %s49
      %p51 = scmp.eq.s32.totalorder %s25, 0
      %p52 = por %p50, %p51
      %s54 = sadd.s32 %s53, 1
      %p57 = scmp.eq.s32.totalorder %s19, 1
      %p58 = scmp.ne.s32.totalorder %s53, %s55
      %p59 = scmp.eq.s32.totalorder %s19, 0
      %p60 = por %p58, %p59
      %p61 = scmp.ne.s32.totalorder %s53, %s55
      %p62 = scmp.eq.s32.totalorder %s24, 1
      %p63 = por %p61, %p62
      %p64 = scmp.ne.s32.totalorder %s55, %s56
      %p65 = scmp.eq.s32.totalorder %s24, 0
      %p66 = por %p64, %p65
      %p67 = scmp.ne.s32.totalorder %s55, %s56
      %p68 = scmp.eq.s32.totalorder %s25, 1
      %p69 = por %p67, %p68
      %p71 = scmp.ne.s32.totalorder %s56, %s70
      %p72 = scmp.eq.s32.totalorder %s25, 0
      %p73 = por %p71, %p72
      %s75 = sadd.s32 %s74, 1
      %p78 = scmp.eq.s32.totalorder %s19, 1
      %p79 = scmp.ne.s32.totalorder %s74, %s76
      %p80 = scmp.eq.s32.totalorder %s19, 0
      %p81 = por %p79, %p80
      %p82 = scmp.ne.s32.totalorder %s74, %s76
      %p83 = scmp.eq.s32.totalorder %s24, 1
      %p84 = por %p82, %p83
      %p85 = scmp.ne.s32.totalorder %s76, %s77
      %p86 = scmp.eq.s32.totalorder %s24, 0
      %p87 = por %p85, %p86
      %p88 = scmp.ne.s32.totalorder %s76, %s77
      %p89 = scmp.eq.s32.totalorder %s25, 1
      %p90 = por %p88, %p89
      %p92 = scmp.ne.s32.totalorder %s77, %s91
      %p93 = scmp.eq.s32.totalorder %s25, 0
      %p94 = por %p92, %p93
      %s96 = sadd.s32 %s95, 1
      %p99 = scmp.eq.s32.totalorder %s19, 1
      %p100 = scmp.ne.s32.totalorder %s95, %s97
      %p101 = scmp.eq.s32.totalorder %s19, 0
      %p102 = por %p100, %p101
      %p103 = scmp.ne.s32.totalorder %s95, %s97
      %p104 = scmp.eq.s32.totalorder %s24, 1
      %p105 = por %p103, %p104
      %p106 = scmp.ne.s32.totalorder %s97, %s98
      %p107 = scmp.eq.s32.totalorder %s24, 0
      %p108 = por %p106, %p107
      %p109 = scmp.ne.s32.totalorder %s97, %s98
      %p110 = scmp.eq.s32.totalorder %s25, 1
      %p111 = por %p109, %p110
      %p113 = scmp.ne.s32.totalorder %s98, %s112
      %p114 = scmp.eq.s32.totalorder %s25, 0
      %p115 = por %p113, %p114
      %s117 = sadd.s32 %s116, 1
      %p120 = scmp.eq.s32.totalorder %s19, 1
      %p121 = scmp.ne.s32.totalorder %s116, %s118
      %p122 = scmp.eq.s32.totalorder %s19, 0
      %p123 = por %p121, %p122
      %p124 = scmp.ne.s32.totalorder %s116, %s118
      %p125 = scmp.eq.s32.totalorder %s24, 1
      %p126 = por %p124, %p125
      %p127 = scmp.ne.s32.totalorder %s118, %s119
      %p128 = scmp.eq.s32.totalorder %s24, 0
      %p129 = por %p127, %p128
      %p130 = scmp.ne.s32.totalorder %s118, %s119
      %p131 = scmp.eq.s32.totalorder %s25, 1
      %p132 = por %p130, %p131
      %p134 = scmp.ne.s32.totalorder %s119, %s133
      %p135 = scmp.eq.s32.totalorder %s25, 0
      %p136 = por %p134, %p135
      %s138 = sadd.s32 %s137, 1
      %p141 = scmp.eq.s32.totalorder %s19, 1
      %p142 = scmp.ne.s32.totalorder %s137, %s139
      %p143 = scmp.eq.s32.totalorder %s19, 0
      %p144 = por %p142, %p143
      %p145 = scmp.ne.s32.totalorder %s137, %s139
      %p146 = scmp.eq.s32.totalorder %s24, 1
      %p147 = por %p145, %p146
      %p148 = scmp.ne.s32.totalorder %s139, %s140
      %p149 = scmp.eq.s32.totalorder %s24, 0
      %p150 = por %p148, %p149
      %p151 = scmp.ne.s32.totalorder %s139, %s140
      %p152 = scmp.eq.s32.totalorder %s25, 1
      %p153 = por %p151, %p152
      %p155 = scmp.ne.s32.totalorder %s140, %s154
      %p156 = scmp.eq.s32.totalorder %s25, 0
      %p157 = por %p155, %p156
      %s159 = sadd.s32 %s158, 1
      %p162 = scmp.eq.s32.totalorder %s19, 1
      %p163 = scmp.ne.s32.totalorder %s158, %s160
      %p164 = scmp.eq.s32.totalorder %s19, 0
      %p165 = por %p163, %p164
      %p166 = scmp.ne.s32.totalorder %s158, %s160
      %p167 = scmp.eq.s32.totalorder %s24, 1
      %p168 = por %p166, %p167
      %p169 = scmp.ne.s32.totalorder %s160, %s161
      %p170 = scmp.eq.s32.totalorder %s24, 0
      %p171 = por %p169, %p170
      %p172 = scmp.ne.s32.totalorder %s160, %s161
      %p173 = scmp.eq.s32.totalorder %s25, 1
      %p174 = por %p172, %p173
      %p176 = scmp.ne.s32.totalorder %s161, %s175
      %p177 = scmp.eq.s32.totalorder %s25, 0
      %p178 = por %p176, %p177
      %s179 = ssub.s32 %s19, %s26
      %p180 = scmp.eq.s32.totalorder %s179, 0
      %s182 = sadd.s32 %s181, 1
      %s183 = scalar_select %p180, %s181, %s182
      %p186 = pneg %p180
      %p187 = scmp.eq.s32.totalorder %s19, 1
      %p188 = por %p186, %p187
      %p189 = scmp.ne.s32.totalorder %s181, %s184
      %p190 = scmp.eq.s32.totalorder %s19, 0
      %p191 = por %p189, %p190
      %p192 = scmp.ne.s32.totalorder %s181, %s184
      %p193 = scmp.eq.s32.totalorder %s24, 1
      %p194 = por %p192, %p193
      %p195 = scmp.ne.s32.totalorder %s184, %s185
      %p196 = scmp.eq.s32.totalorder %s24, 0
      %p197 = por %p195, %p196
      %p198 = scmp.ne.s32.totalorder %s184, %s185
      %p199 = scmp.eq.s32.totalorder %s25, 1
      %p200 = por %p198, %p199
      %p202 = scmp.ne.s32.totalorder %s185, %s201
      %p203 = scmp.eq.s32.totalorder %s25, 0
      %p204 = por %p202, %p203
      %p205 = scmp.le.s32.totalorder 1, %s19
      %p206 = scmp.lt.s32.totalorder %s19, 3
      %p207 = pnand %p205, %p206
      %p208 = pneg %p207
      // Predicated region
      $region9: #{tpu_custom_call.1} parent=5 // pred_check
        _
      $region10: #{tpu_custom_call.1} parent=5 // pred_check_branch
        %210 = sbr.rel (%p207) target = $region12
      $region11: #{tpu_custom_call.1} parent=5 // pred_region
        %s211 = ssub.s32 %s19, 1
        // Predicated region
        $region13: #{tpu_custom_call.1} parent=11 // pred_check
          %p212 = pneg %p66
        $region14: #{tpu_custom_call.1} parent=11 // pred_check_branch
          %214 = sbr.rel (%p212) target = $region16
        $region15: #{tpu_custom_call.1} parent=11 // pred_region
          _
        $region16: #{tpu_custom_call.1} parent=11 // pred_fallthru
          _
        // Predicated region
        $region17: #{tpu_custom_call.1} parent=11 // pred_check
          %p215 = pneg %p87
        $region18: #{tpu_custom_call.1} parent=11 // pred_check_branch
          %217 = sbr.rel (%p215) target = $region20
        $region19: #{tpu_custom_call.1} parent=11 // pred_region
          _
        $region20: #{tpu_custom_call.1} parent=11 // pred_fallthru
          _
        // Predicated region
        $region21: #{tpu_custom_call.1} parent=11 // pred_check
          %p218 = pneg %p108
        $region22: #{tpu_custom_call.1} parent=11 // pred_check_branch
          %220 = sbr.rel (%p218) target = $region24
        $region23: #{tpu_custom_call.1} parent=11 // pred_region
          _
        $region24: #{tpu_custom_call.1} parent=11 // pred_fallthru
          _
        // Predicated region
        $region25: #{tpu_custom_call.1} parent=11 // pred_check
          %p221 = pneg %p129
        $region26: #{tpu_custom_call.1} parent=11 // pred_check_branch
          %223 = sbr.rel (%p221) target = $region28
        $region27: #{tpu_custom_call.1} parent=11 // pred_region
          _
        $region28: #{tpu_custom_call.1} parent=11 // pred_fallthru
          _
        // Predicated region
        $region29: #{tpu_custom_call.1} parent=11 // pred_check
          %p224 = pneg %p150
        $region30: #{tpu_custom_call.1} parent=11 // pred_check_branch
          %226 = sbr.rel (%p224) target = $region32
        $region31: #{tpu_custom_call.1} parent=11 // pred_region
          _
        $region32: #{tpu_custom_call.1} parent=11 // pred_fallthru
          _
        // Predicated region
        $region33: #{tpu_custom_call.1} parent=11 // pred_check
          %p227 = pneg %p171
        $region34: #{tpu_custom_call.1} parent=11 // pred_check_branch
          %229 = sbr.rel (%p227) target = $region36
        $region35: #{tpu_custom_call.1} parent=11 // pred_region
          _
        $region36: #{tpu_custom_call.1} parent=11 // pred_fallthru
          _
      $region12: #{tpu_custom_call.1} parent=5 // pred_fallthru
        _
      %p230 = scmp.lt.s32.totalorder %s19, 2
      // Predicated region
      $region37: #{tpu_custom_call.1} parent=5 // pred_check
        %p231 = pneg %p230
      $region38: #{tpu_custom_call.1} parent=5 // pred_check_branch
        %233 = sbr.rel (%p231) target = $region40
      $region39: #{tpu_custom_call.1} parent=5 // pred_region
        // Predicated region
        $region41: #{tpu_custom_call.1} parent=39 // pred_check
          %p234 = pneg %p39
        $region42: #{tpu_custom_call.1} parent=39 // pred_check_branch
          %236 = sbr.rel (%p234) target = $region44
        $region43: #{tpu_custom_call.1} parent=39 // pred_region
          %s237 = sand.u32 %s29, 1
          %s238 = scalar_lea.sflag [#allocation3], %s237
          %s239 = sand.u32 %s29, 1
          %s240 = smul.addr %s239, 256
          %s241 = scalar_lea.vmem [#allocation2], %s240
          %s243 = ssub.s32 4096, 4096
          %244 = vsyncadd %s238, %s243
          %s245 = smul.addr %s19, 32
          %s246 = smul.addr %s245, 128
          %s247 = scalar_lea.hbm %s0, %s246
          %s248 = sshll.u32 %s241, 4
          %s249 = int_to_ptr.vmem [resolvable:$true] %s248
          %254 = dma.hbm_to_vmem [thread:$0]  %s247, 4096, %s249, %s238, 128, 128, 8
        $region44: #{tpu_custom_call.1} parent=39 // pred_fallthru
          _
      $region40: #{tpu_custom_call.1} parent=5 // pred_fallthru
        _
      %p255 = scmp.le.s32.totalorder 1, %s19
      %p256 = scmp.lt.s32.totalorder %s19, 3
      %p257 = pnand %p255, %p256
      %p258 = pneg %p257
      // Predicated region
      $region45: #{tpu_custom_call.1} parent=5 // pred_check
        _
      $region46: #{tpu_custom_call.1} parent=5 // pred_check_branch
        %260 = sbr.rel (%p257) target = $region48
      $region47: #{tpu_custom_call.1} parent=5 // pred_region
        %s261 = ssub.s32 %s19, 1
        %s262 = sand.u32 %s32, 1
        %s263 = scalar_lea.sflag [#allocation3], %s262
        %s264 = sand.u32 %s32, 1
        %s265 = smul.addr %s264, 256
        %s266 = scalar_lea.vmem [#allocation2], %s265
        // Predicated region
        $region49: #{tpu_custom_call.1} parent=47 // pred_check
          %p267 = pneg %p45
        $region50: #{tpu_custom_call.1} parent=47 // pred_check_branch
          %269 = sbr.rel (%p267) target = $region52
        $region51: #{tpu_custom_call.1} parent=47 // pred_region
          %270 = dma.done %s263, 4096
        $region52: #{tpu_custom_call.1} parent=47 // pred_fallthru
          _
        %s271 = sand.u32 %s32, 1
        %s272 = scalar_lea.sflag [#allocation3], %s271
        %s273 = sand.u32 %s32, 1
        %s274 = smul.addr %s273, 256
        %s275 = scalar_lea.vmem [#allocation2], %s274
        %p276 = pneg %p45
        %p277 = pneg %p42
        %p278 = pneg %p66
        %p279 = pneg %p63
        %p280 = pneg %p87
        %p281 = pneg %p84
        %p282 = pneg %p108
        %p283 = pneg %p105
        %p284 = pneg %p129
        %p285 = pneg %p126
        %p286 = pneg %p150
        %p287 = pneg %p147
        %p288 = pneg %p171
        %p289 = pneg %p168
        %p290 = pneg %p197
        %p291 = pneg %p194
        %s292 = sand.u32 %s184, 1
        %s293 = scalar_lea.sflag [#allocation4], %s292
        %s294 = sand.u32 %s184, 1
        %s295 = smul.addr %s294, 256
        %s296 = scalar_lea.vmem [#allocation5], %s295
        %v298 = vld [vmem:[%s266] sm:$0xff]
        %v299 = vld [vmem:[%s266 + $0x8] sm:$0xff]
        %v300 = vld [vmem:[%s266 + $0x10] sm:$0xff]
        %v301 = vld [vmem:[%s266 + $0x18] sm:$0xff]
        %v302 = vld [vmem:[%s266 + $0x20] sm:$0xff]
        %v303 = vld [vmem:[%s266 + $0x28] sm:$0xff]
        %v304 = vld [vmem:[%s266 + $0x30] sm:$0xff]
        %v305 = vld [vmem:[%s266 + $0x38] sm:$0xff]
        %v306 = vld [vmem:[%s266 + $0x40] sm:$0xff]
        %v307 = vld [vmem:[%s266 + $0x48] sm:$0xff]
        %v308 = vld [vmem:[%s266 + $0x50] sm:$0xff]
        %v309 = vld [vmem:[%s266 + $0x58] sm:$0xff]
        %v310 = vld [vmem:[%s266 + $0x60] sm:$0xff]
        %v311 = vld [vmem:[%s266 + $0x68] sm:$0xff]
        %v312 = vld [vmem:[%s266 + $0x70] sm:$0xff]
        %v313 = vld [vmem:[%s266 + $0x78] sm:$0xff]
        %v314 = vld [vmem:[%s266 + $0x80] sm:$0xff]
        %v315 = vld [vmem:[%s266 + $0x88] sm:$0xff]
        %v316 = vld [vmem:[%s266 + $0x90] sm:$0xff]
        %v317 = vld [vmem:[%s266 + $0x98] sm:$0xff]
        %v318 = vld [vmem:[%s266 + $0xa0] sm:$0xff]
        %v319 = vld [vmem:[%s266 + $0xa8] sm:$0xff]
        %v320 = vld [vmem:[%s266 + $0xb0] sm:$0xff]
        %v321 = vld [vmem:[%s266 + $0xb8] sm:$0xff]
        %v322 = vld [vmem:[%s266 + $0xc0] sm:$0xff]
        %v323 = vld [vmem:[%s266 + $0xc8] sm:$0xff]
        %v324 = vld [vmem:[%s266 + $0xd0] sm:$0xff]
        %v325 = vld [vmem:[%s266 + $0xd8] sm:$0xff]
        %v326 = vld [vmem:[%s266 + $0xe0] sm:$0xff]
        %v327 = vld [vmem:[%s266 + $0xe8] sm:$0xff]
        %v328 = vld [vmem:[%s266 + $0xf0] sm:$0xff]
        %v329 = vld [vmem:[%s266 + $0xf8] sm:$0xff]
        %v330 = vld [vmem:[%s1] sm:$0x1]
        %v331 = vld [vmem:[%s2] sm:$0x1]
        %v333 = vlaneseq
        %v334 = vshrl.u32 %v333, 7
        %v335 = vsub.s32 0, %v334
        %v336 = vrot.slane %v330, %v335
        %v338 = vmul.f32 %v298, %v336
        %v339 = vmul.f32 %v299, %v336
        %v340 = vmul.f32 %v300, %v336
        %v341 = vmul.f32 %v301, %v336
        %v342 = vmul.f32 %v302, %v336
        %v343 = vmul.f32 %v303, %v336
        %v344 = vmul.f32 %v304, %v336
        %v345 = vmul.f32 %v305, %v336
        %v346 = vmul.f32 %v306, %v336
        %v347 = vmul.f32 %v307, %v336
        %v348 = vmul.f32 %v308, %v336
        %v349 = vmul.f32 %v309, %v336
        %v350 = vmul.f32 %v310, %v336
        %v351 = vmul.f32 %v311, %v336
        %v352 = vmul.f32 %v312, %v336
        %v353 = vmul.f32 %v313, %v336
        %v354 = vmul.f32 %v314, %v336
        %v355 = vmul.f32 %v315, %v336
        %v356 = vmul.f32 %v316, %v336
        %v357 = vmul.f32 %v317, %v336
        %v358 = vmul.f32 %v318, %v336
        %v359 = vmul.f32 %v319, %v336
        %v360 = vmul.f32 %v320, %v336
        %v361 = vmul.f32 %v321, %v336
        %v362 = vmul.f32 %v322, %v336
        %v363 = vmul.f32 %v323, %v336
        %v364 = vmul.f32 %v324, %v336
        %v365 = vmul.f32 %v325, %v336
        %v366 = vmul.f32 %v326, %v336
        %v367 = vmul.f32 %v327, %v336
        %v368 = vmul.f32 %v328, %v336
        %v369 = vmul.f32 %v329, %v336
        %v371 = vlaneseq
        %v372 = vshrl.u32 %v371, 7
        %v373 = vsub.s32 0, %v372
        %v374 = vrot.slane %v331, %v373
        %v376 = vadd.f32 %v338, %v374
        %v377 = vadd.f32 %v339, %v374
        %v378 = vadd.f32 %v340, %v374
        %v379 = vadd.f32 %v341, %v374
        %v380 = vadd.f32 %v342, %v374
        %v381 = vadd.f32 %v343, %v374
        %v382 = vadd.f32 %v344, %v374
        %v383 = vadd.f32 %v345, %v374
        %v384 = vadd.f32 %v346, %v374
        %v385 = vadd.f32 %v347, %v374
        %v386 = vadd.f32 %v348, %v374
        %v387 = vadd.f32 %v349, %v374
        %v388 = vadd.f32 %v350, %v374
        %v389 = vadd.f32 %v351, %v374
        %v390 = vadd.f32 %v352, %v374
        %v391 = vadd.f32 %v353, %v374
        %v392 = vadd.f32 %v354, %v374
        %v393 = vadd.f32 %v355, %v374
        %v394 = vadd.f32 %v356, %v374
        %v395 = vadd.f32 %v357, %v374
        %v396 = vadd.f32 %v358, %v374
        %v397 = vadd.f32 %v359, %v374
        %v398 = vadd.f32 %v360, %v374
        %v399 = vadd.f32 %v361, %v374
        %v400 = vadd.f32 %v362, %v374
        %v401 = vadd.f32 %v363, %v374
        %v402 = vadd.f32 %v364, %v374
        %v403 = vadd.f32 %v365, %v374
        %v404 = vadd.f32 %v366, %v374
        %v405 = vadd.f32 %v367, %v374
        %v406 = vadd.f32 %v368, %v374
        %v407 = vadd.f32 %v369, %v374
        %v408 = vmax.f32 %v376, 0.0
        %v409 = vmax.f32 %v377, 0.0
        %v410 = vmax.f32 %v378, 0.0
        %v411 = vmax.f32 %v379, 0.0
        %v412 = vmax.f32 %v380, 0.0
        %v413 = vmax.f32 %v381, 0.0
        %v414 = vmax.f32 %v382, 0.0
        %v415 = vmax.f32 %v383, 0.0
        %v416 = vmax.f32 %v384, 0.0
        %v417 = vmax.f32 %v385, 0.0
        %v418 = vmax.f32 %v386, 0.0
        %v419 = vmax.f32 %v387, 0.0
        %v420 = vmax.f32 %v388, 0.0
        %v421 = vmax.f32 %v389, 0.0
        %v422 = vmax.f32 %v390, 0.0
        %v423 = vmax.f32 %v391, 0.0
        %v424 = vmax.f32 %v392, 0.0
        %v425 = vmax.f32 %v393, 0.0
        %v426 = vmax.f32 %v394, 0.0
        %v427 = vmax.f32 %v395, 0.0
        %v428 = vmax.f32 %v396, 0.0
        %v429 = vmax.f32 %v397, 0.0
        %v430 = vmax.f32 %v398, 0.0
        %v431 = vmax.f32 %v399, 0.0
        %v432 = vmax.f32 %v400, 0.0
        %v433 = vmax.f32 %v401, 0.0
        %v434 = vmax.f32 %v402, 0.0
        %v435 = vmax.f32 %v403, 0.0
        %v436 = vmax.f32 %v404, 0.0
        %v437 = vmax.f32 %v405, 0.0
        %v438 = vmax.f32 %v406, 0.0
        %v439 = vmax.f32 %v407, 0.0
        %v440 = vpack.c.bf16 %v409, %v408
        %v441 = vpack.c.bf16 %v411, %v410
        %v442 = vpack.c.bf16 %v413, %v412
        %v443 = vpack.c.bf16 %v415, %v414
        %v444 = vpack.c.bf16 %v417, %v416
        %v445 = vpack.c.bf16 %v419, %v418
        %v446 = vpack.c.bf16 %v421, %v420
        %v447 = vpack.c.bf16 %v423, %v422
        %v448 = vpack.c.bf16 %v425, %v424
        %v449 = vpack.c.bf16 %v427, %v426
        %v450 = vpack.c.bf16 %v429, %v428
        %v451 = vpack.c.bf16 %v431, %v430
        %v452 = vpack.c.bf16 %v433, %v432
        %v453 = vpack.c.bf16 %v435, %v434
        %v454 = vpack.c.bf16 %v437, %v436
        %v455 = vpack.c.bf16 %v439, %v438
        %v457 = vshrl.u32 %v440, 16
        %v459 = vrot.slane %v457, 7
        %v460 = vshll.u32 %v440, 16
        %v462 = vor.u32 %v459, %v460
        %v464 = vshrl.u32 %v441, 16
        %v466 = vrot.slane %v464, 7
        %v467 = vshll.u32 %v441, 16
        %v469 = vor.u32 %v466, %v467
        %v471 = vshrl.u32 %v442, 16
        %v473 = vrot.slane %v471, 7
        %v474 = vshll.u32 %v442, 16
        %v476 = vor.u32 %v473, %v474
        %v478 = vshrl.u32 %v443, 16
        %v480 = vrot.slane %v478, 7
        %v481 = vshll.u32 %v443, 16
        %v483 = vor.u32 %v480, %v481
        %v485 = vshrl.u32 %v444, 16
        %v487 = vrot.slane %v485, 7
        %v488 = vshll.u32 %v444, 16
        %v490 = vor.u32 %v487, %v488
        %v492 = vshrl.u32 %v445, 16
        %v494 = vrot.slane %v492, 7
        %v495 = vshll.u32 %v445, 16
        %v497 = vor.u32 %v494, %v495
        %v499 = vshrl.u32 %v446, 16
        %v501 = vrot.slane %v499, 7
        %v502 = vshll.u32 %v446, 16
        %v504 = vor.u32 %v501, %v502
        %v506 = vshrl.u32 %v447, 16
        %v508 = vrot.slane %v506, 7
        %v509 = vshll.u32 %v447, 16
        %v511 = vor.u32 %v508, %v509
        %v513 = vshrl.u32 %v448, 16
        %v515 = vrot.slane %v513, 7
        %v516 = vshll.u32 %v448, 16
        %v518 = vor.u32 %v515, %v516
        %v520 = vshrl.u32 %v449, 16
        %v522 = vrot.slane %v520, 7
        %v523 = vshll.u32 %v449, 16
        %v525 = vor.u32 %v522, %v523
        %v527 = vshrl.u32 %v450, 16
        %v529 = vrot.slane %v527, 7
        %v530 = vshll.u32 %v450, 16
        %v532 = vor.u32 %v529, %v530
        %v534 = vshrl.u32 %v451, 16
        %v536 = vrot.slane %v534, 7
        %v537 = vshll.u32 %v451, 16
        %v539 = vor.u32 %v536, %v537
        %v541 = vshrl.u32 %v452, 16
        %v543 = vrot.slane %v541, 7
        %v544 = vshll.u32 %v452, 16
        %v546 = vor.u32 %v543, %v544
        %v548 = vshrl.u32 %v453, 16
        %v550 = vrot.slane %v548, 7
        %v551 = vshll.u32 %v453, 16
        %v553 = vor.u32 %v550, %v551
        %v555 = vshrl.u32 %v454, 16
        %v557 = vrot.slane %v555, 7
        %v558 = vshll.u32 %v454, 16
        %v560 = vor.u32 %v557, %v558
        %v562 = vshrl.u32 %v455, 16
        %v564 = vrot.slane %v562, 7
        %v565 = vshll.u32 %v455, 16
        %v567 = vor.u32 %v564, %v565
        %vm600 = vcmask 1040384
        %vm601 = vsmask.f32 256
        %vm602 = vmand %vm600, %vm601
        %v603 = vsel %vm602, 0, %v462
        %v604 = vsel %vm602, 0, %v469
        %v605 = vsel %vm602, 0, %v476
        %v606 = vsel %vm602, 0, %v483
        %v607 = vsel %vm602, 0, %v490
        %v608 = vsel %vm602, 0, %v497
        %v609 = vsel %vm602, 0, %v504
        %v610 = vsel %vm602, 0, %v511
        %v611 = vsel %vm602, 0, %v518
        %v612 = vsel %vm602, 0, %v525
        %v613 = vsel %vm602, 0, %v532
        %v614 = vsel %vm602, 0, %v539
        %v615 = vsel %vm602, 0, %v546
        %v616 = vsel %vm602, 0, %v553
        %v617 = vsel %vm602, 0, %v560
        %v618 = vsel %vm602, 0, %v567
        %v619 = vsel %vm602, %v459, 0
        %v620 = vsel %vm602, %v466, 0
        %v621 = vsel %vm602, %v473, 0
        %v622 = vsel %vm602, %v480, 0
        %v623 = vsel %vm602, %v487, 0
        %v624 = vsel %vm602, %v494, 0
        %v625 = vsel %vm602, %v501, 0
        %v626 = vsel %vm602, %v508, 0
        %v627 = vsel %vm602, %v515, 0
        %v628 = vsel %vm602, %v522, 0
        %v629 = vsel %vm602, %v529, 0
        %v630 = vsel %vm602, %v536, 0
        %v631 = vsel %vm602, %v543, 0
        %v632 = vsel %vm602, %v550, 0
        %v633 = vsel %vm602, %v557, 0
        %v634 = vsel %vm602, %v564, 0
        %vm635 = vsmask.f32 7424
        %v637 = vshrl.u32 0, 16
        %v639 = vshll.u32 0, 16
        %v641 = vrot.slane %v639, 1
        %v642 = vor.u32 %v637, %v641
        %v643 = vsel %vm635, %v642, %v641
        %v645 = vshrl.u32 %v603, 16
        %v647 = vshll.u32 %v603, 16
        %v649 = vrot.slane %v647, 1
        %v650 = vor.u32 %v645, %v649
        %v652 = vshll.u32 %v619, 16
        %v654 = vrot.slane %v652, 1
        %v655 = vsel %vm635, %v650, %v654
        %v657 = vshrl.u32 %v604, 16
        %v659 = vshll.u32 %v604, 16
        %v661 = vrot.slane %v659, 1
        %v662 = vor.u32 %v657, %v661
        %v664 = vshll.u32 %v620, 16
        %v666 = vrot.slane %v664, 1
        %v667 = vsel %vm635, %v662, %v666
        %v669 = vshrl.u32 %v605, 16
        %v671 = vshll.u32 %v605, 16
        %v673 = vrot.slane %v671, 1
        %v674 = vor.u32 %v669, %v673
        %v676 = vshll.u32 %v621, 16
        %v678 = vrot.slane %v676, 1
        %v679 = vsel %vm635, %v674, %v678
        %v681 = vshrl.u32 %v606, 16
        %v683 = vshll.u32 %v606, 16
        %v685 = vrot.slane %v683, 1
        %v686 = vor.u32 %v681, %v685
        %v688 = vshll.u32 %v622, 16
        %v690 = vrot.slane %v688, 1
        %v691 = vsel %vm635, %v686, %v690
        %v693 = vshrl.u32 %v607, 16
        %v695 = vshll.u32 %v607, 16
        %v697 = vrot.slane %v695, 1
        %v698 = vor.u32 %v693, %v697
        %v700 = vshll.u32 %v623, 16
        %v702 = vrot.slane %v700, 1
        %v703 = vsel %vm635, %v698, %v702
        %v705 = vshrl.u32 %v608, 16
        %v707 = vshll.u32 %v608, 16
        %v709 = vrot.slane %v707, 1
        %v710 = vor.u32 %v705, %v709
        %v712 = vshll.u32 %v624, 16
        %v714 = vrot.slane %v712, 1
        %v715 = vsel %vm635, %v710, %v714
        %v717 = vshrl.u32 %v609, 16
        %v719 = vshll.u32 %v609, 16
        %v721 = vrot.slane %v719, 1
        %v722 = vor.u32 %v717, %v721
        %v724 = vshll.u32 %v625, 16
        %v726 = vrot.slane %v724, 1
        %v727 = vsel %vm635, %v722, %v726
        %v729 = vshrl.u32 %v610, 16
        %v731 = vshll.u32 %v610, 16
        %v733 = vrot.slane %v731, 1
        %v734 = vor.u32 %v729, %v733
        %v736 = vshll.u32 %v626, 16
        %v738 = vrot.slane %v736, 1
        %v739 = vsel %vm635, %v734, %v738
        %v741 = vshrl.u32 %v611, 16
        %v743 = vshll.u32 %v611, 16
        %v745 = vrot.slane %v743, 1
        %v746 = vor.u32 %v741, %v745
        %v748 = vshll.u32 %v627, 16
        %v750 = vrot.slane %v748, 1
        %v751 = vsel %vm635, %v746, %v750
        %v753 = vshrl.u32 %v612, 16
        %v755 = vshll.u32 %v612, 16
        %v757 = vrot.slane %v755, 1
        %v758 = vor.u32 %v753, %v757
        %v760 = vshll.u32 %v628, 16
        %v762 = vrot.slane %v760, 1
        %v763 = vsel %vm635, %v758, %v762
        %v765 = vshrl.u32 %v613, 16
        %v767 = vshll.u32 %v613, 16
        %v769 = vrot.slane %v767, 1
        %v770 = vor.u32 %v765, %v769
        %v772 = vshll.u32 %v629, 16
        %v774 = vrot.slane %v772, 1
        %v775 = vsel %vm635, %v770, %v774
        %v777 = vshrl.u32 %v614, 16
        %v779 = vshll.u32 %v614, 16
        %v781 = vrot.slane %v779, 1
        %v782 = vor.u32 %v777, %v781
        %v784 = vshll.u32 %v630, 16
        %v786 = vrot.slane %v784, 1
        %v787 = vsel %vm635, %v782, %v786
        %v789 = vshrl.u32 %v615, 16
        %v791 = vshll.u32 %v615, 16
        %v793 = vrot.slane %v791, 1
        %v794 = vor.u32 %v789, %v793
        %v796 = vshll.u32 %v631, 16
        %v798 = vrot.slane %v796, 1
        %v799 = vsel %vm635, %v794, %v798
        %v801 = vshrl.u32 %v616, 16
        %v803 = vshll.u32 %v616, 16
        %v805 = vrot.slane %v803, 1
        %v806 = vor.u32 %v801, %v805
        %v808 = vshll.u32 %v632, 16
        %v810 = vrot.slane %v808, 1
        %v811 = vsel %vm635, %v806, %v810
        %v813 = vshrl.u32 %v617, 16
        %v815 = vshll.u32 %v617, 16
        %v817 = vrot.slane %v815, 1
        %v818 = vor.u32 %v813, %v817
        %v820 = vshll.u32 %v633, 16
        %v822 = vrot.slane %v820, 1
        %v823 = vsel %vm635, %v818, %v822
        %vm855 = vcmask 1046528
        %v856 = vrot.slane 0, 1
        %v857 = vsel %vm855, %v856, %v856
        %v858 = vrot.slane %v603, 1
        %v859 = vrot.slane %v619, 1
        %v860 = vsel %vm855, %v858, %v859
        %v861 = vrot.slane %v604, 1
        %v862 = vrot.slane %v620, 1
        %v863 = vsel %vm855, %v861, %v862
        %v864 = vrot.slane %v605, 1
        %v865 = vrot.slane %v621, 1
        %v866 = vsel %vm855, %v864, %v865
        %v867 = vrot.slane %v606, 1
        %v868 = vrot.slane %v622, 1
        %v869 = vsel %vm855, %v867, %v868
        %v870 = vrot.slane %v607, 1
        %v871 = vrot.slane %v623, 1
        %v872 = vsel %vm855, %v870, %v871
        %v873 = vrot.slane %v608, 1
        %v874 = vrot.slane %v624, 1
        %v875 = vsel %vm855, %v873, %v874
        %v876 = vrot.slane %v609, 1
        %v877 = vrot.slane %v625, 1
        %v878 = vsel %vm855, %v876, %v877
        %v879 = vrot.slane %v610, 1
        %v880 = vrot.slane %v626, 1
        %v881 = vsel %vm855, %v879, %v880
        %v882 = vrot.slane %v611, 1
        %v883 = vrot.slane %v627, 1
        %v884 = vsel %vm855, %v882, %v883
        %v885 = vrot.slane %v612, 1
        %v886 = vrot.slane %v628, 1
        %v887 = vsel %vm855, %v885, %v886
        %v888 = vrot.slane %v613, 1
        %v889 = vrot.slane %v629, 1
        %v890 = vsel %vm855, %v888, %v889
        %v891 = vrot.slane %v614, 1
        %v892 = vrot.slane %v630, 1
        %v893 = vsel %vm855, %v891, %v892
        %v894 = vrot.slane %v615, 1
        %v895 = vrot.slane %v631, 1
        %v896 = vsel %vm855, %v894, %v895
        %v897 = vrot.slane %v616, 1
        %v898 = vrot.slane %v632, 1
        %v899 = vsel %vm855, %v897, %v898
        %v900 = vrot.slane %v617, 1
        %v901 = vrot.slane %v633, 1
        %v902 = vsel %vm855, %v900, %v901
        %v904 = vshrl.u32 %v618, 16
        %v906 = vshll.u32 %v618, 16
        %v908 = vrot.slane %v906, 1
        %v909 = vor.u32 %v904, %v908
        %v911 = vshll.u32 %v634, 16
        %v913 = vrot.slane %v911, 1
        %v914 = vsel %vm635, %v909, %v913
        %v917 = vrot.slane %v618, 1
        %v918 = vrot.slane %v634, 1
        %v919 = vsel %vm855, %v917, %v918
        %920 = vrot.lane.b32.xlu0 %v643, 16
        %v921 = vpop.permute.xlu0 %920
        %922 = vrot.lane.b32.xlu0 %v655, 16
        %v923 = vpop.permute.xlu0 %922
        %924 = vrot.lane.b32.xlu0 %v667, 16
        %v925 = vpop.permute.xlu0 %924
        %926 = vrot.lane.b32.xlu0 %v679, 16
        %v927 = vpop.permute.xlu0 %926
        %928 = vrot.lane.b32.xlu0 %v691, 16
        %v929 = vpop.permute.xlu0 %928
        %930 = vrot.lane.b32.xlu0 %v703, 16
        %v931 = vpop.permute.xlu0 %930
        %932 = vrot.lane.b32.xlu0 %v715, 16
        %v933 = vpop.permute.xlu0 %932
        %934 = vrot.lane.b32.xlu0 %v727, 16
        %v935 = vpop.permute.xlu0 %934
        %936 = vrot.lane.b32.xlu0 %v739, 16
        %v937 = vpop.permute.xlu0 %936
        %938 = vrot.lane.b32.xlu0 %v751, 16
        %v939 = vpop.permute.xlu0 %938
        %940 = vrot.lane.b32.xlu0 %v763, 16
        %v941 = vpop.permute.xlu0 %940
        %942 = vrot.lane.b32.xlu0 %v775, 16
        %v943 = vpop.permute.xlu0 %942
        %944 = vrot.lane.b32.xlu0 %v787, 16
        %v945 = vpop.permute.xlu0 %944
        %946 = vrot.lane.b32.xlu0 %v799, 16
        %v947 = vpop.permute.xlu0 %946
        %948 = vrot.lane.b32.xlu0 %v811, 16
        %v949 = vpop.permute.xlu0 %948
        %950 = vrot.lane.b32.xlu0 %v823, 16
        %v951 = vpop.permute.xlu0 %950
        %952 = vrot.lane.b32.xlu0 %v857, 32
        %v953 = vpop.permute.xlu0 %952
        %954 = vrot.lane.b32.xlu0 %v860, 32
        %v955 = vpop.permute.xlu0 %954
        %956 = vrot.lane.b32.xlu0 %v863, 32
        %v957 = vpop.permute.xlu0 %956
        %958 = vrot.lane.b32.xlu0 %v866, 32
        %v959 = vpop.permute.xlu0 %958
        %960 = vrot.lane.b32.xlu0 %v869, 32
        %v961 = vpop.permute.xlu0 %960
        %962 = vrot.lane.b32.xlu0 %v872, 32
        %v963 = vpop.permute.xlu0 %962
        %964 = vrot.lane.b32.xlu0 %v875, 32
        %v965 = vpop.permute.xlu0 %964
        %966 = vrot.lane.b32.xlu0 %v878, 32
        %v967 = vpop.permute.xlu0 %966
        %968 = vrot.lane.b32.xlu0 %v881, 32
        %v969 = vpop.permute.xlu0 %968
        %970 = vrot.lane.b32.xlu0 %v884, 32
        %v971 = vpop.permute.xlu0 %970
        %972 = vrot.lane.b32.xlu0 %v887, 32
        %v973 = vpop.permute.xlu0 %972
        %974 = vrot.lane.b32.xlu0 %v890, 32
        %v975 = vpop.permute.xlu0 %974
        %976 = vrot.lane.b32.xlu0 %v893, 32
        %v977 = vpop.permute.xlu0 %976
        %978 = vrot.lane.b32.xlu0 %v896, 32
        %v979 = vpop.permute.xlu0 %978
        %980 = vrot.lane.b32.xlu0 %v899, 32
        %v981 = vpop.permute.xlu0 %980
        %982 = vrot.lane.b32.xlu0 %v902, 32
        %v983 = vpop.permute.xlu0 %982
        %984 = vrot.lane.b32.xlu0 %v603, 48
        %v985 = vpop.permute.xlu0 %984
        %986 = vrot.lane.b32.xlu0 %v604, 48
        %v987 = vpop.permute.xlu0 %986
        %988 = vrot.lane.b32.xlu0 %v605, 48
        %v989 = vpop.permute.xlu0 %988
        %990 = vrot.lane.b32.xlu0 %v606, 48
        %v991 = vpop.permute.xlu0 %990
        %992 = vrot.lane.b32.xlu0 %v607, 48
        %v993 = vpop.permute.xlu0 %992
        %994 = vrot.lane.b32.xlu0 %v608, 48
        %v995 = vpop.permute.xlu0 %994
        %996 = vrot.lane.b32.xlu0 %v609, 48
        %v997 = vpop.permute.xlu0 %996
        %998 = vrot.lane.b32.xlu0 %v610, 48
        %v999 = vpop.permute.xlu0 %998
        %1000 = vrot.lane.b32.xlu0 %v611, 48
        %v1001 = vpop.permute.xlu0 %1000
        %1002 = vrot.lane.b32.xlu0 %v612, 48
        %v1003 = vpop.permute.xlu0 %1002
        %1004 = vrot.lane.b32.xlu0 %v613, 48
        %v1005 = vpop.permute.xlu0 %1004
        %1006 = vrot.lane.b32.xlu0 %v614, 48
        %v1007 = vpop.permute.xlu0 %1006
        %1008 = vrot.lane.b32.xlu0 %v615, 48
        %v1009 = vpop.permute.xlu0 %1008
        %1010 = vrot.lane.b32.xlu0 %v616, 48
        %v1011 = vpop.permute.xlu0 %1010
        %1012 = vrot.lane.b32.xlu0 %v617, 48
        %v1013 = vpop.permute.xlu0 %1012
        %1014 = vrot.lane.b32.xlu0 %v618, 48
        %v1015 = vpop.permute.xlu0 %1014
        %1016 = vrot.lane.b32.xlu0 %v655, 64
        %v1017 = vpop.permute.xlu0 %1016
        %1018 = vrot.lane.b32.xlu0 %v667, 64
        %v1019 = vpop.permute.xlu0 %1018
        %1020 = vrot.lane.b32.xlu0 %v679, 64
        %v1021 = vpop.permute.xlu0 %1020
        %1022 = vrot.lane.b32.xlu0 %v691, 64
        %v1023 = vpop.permute.xlu0 %1022
        %1024 = vrot.lane.b32.xlu0 %v703, 64
        %v1025 = vpop.permute.xlu0 %1024
        %1026 = vrot.lane.b32.xlu0 %v715, 64
        %v1027 = vpop.permute.xlu0 %1026
        %1028 = vrot.lane.b32.xlu0 %v727, 64
        %v1029 = vpop.permute.xlu0 %1028
        %1030 = vrot.lane.b32.xlu0 %v739, 64
        %v1031 = vpop.permute.xlu0 %1030
        %1032 = vrot.lane.b32.xlu0 %v751, 64
        %v1033 = vpop.permute.xlu0 %1032
        %1034 = vrot.lane.b32.xlu0 %v763, 64
        %v1035 = vpop.permute.xlu0 %1034
        %1036 = vrot.lane.b32.xlu0 %v775, 64
        %v1037 = vpop.permute.xlu0 %1036
        %1038 = vrot.lane.b32.xlu0 %v787, 64
        %v1039 = vpop.permute.xlu0 %1038
        %1040 = vrot.lane.b32.xlu0 %v799, 64
        %v1041 = vpop.permute.xlu0 %1040
        %1042 = vrot.lane.b32.xlu0 %v811, 64
        %v1043 = vpop.permute.xlu0 %1042
        %1044 = vrot.lane.b32.xlu0 %v823, 64
        %v1045 = vpop.permute.xlu0 %1044
        %1046 = vrot.lane.b32.xlu0 %v914, 64
        %v1047 = vpop.permute.xlu0 %1046
        %1048 = vrot.lane.b32.xlu0 %v860, 80
        %v1049 = vpop.permute.xlu0 %1048
        %1050 = vrot.lane.b32.xlu0 %v863, 80
        %v1051 = vpop.permute.xlu0 %1050
        %1052 = vrot.lane.b32.xlu0 %v866, 80
        %v1053 = vpop.permute.xlu0 %1052
        %1054 = vrot.lane.b32.xlu0 %v869, 80
        %v1055 = vpop.permute.xlu0 %1054
        %1056 = vrot.lane.b32.xlu0 %v872, 80
        %v1057 = vpop.permute.xlu0 %1056
        %1058 = vrot.lane.b32.xlu0 %v875, 80
        %v1059 = vpop.permute.xlu0 %1058
        %1060 = vrot.lane.b32.xlu0 %v878, 80
        %v1061 = vpop.permute.xlu0 %1060
        %1062 = vrot.lane.b32.xlu0 %v881, 80
        %v1063 = vpop.permute.xlu0 %1062
        %1064 = vrot.lane.b32.xlu0 %v884, 80
        %v1065 = vpop.permute.xlu0 %1064
        %1066 = vrot.lane.b32.xlu0 %v887, 80
        %v1067 = vpop.permute.xlu0 %1066
        %1068 = vrot.lane.b32.xlu0 %v890, 80
        %v1069 = vpop.permute.xlu0 %1068
        %1070 = vrot.lane.b32.xlu0 %v893, 80
        %v1071 = vpop.permute.xlu0 %1070
        %1072 = vrot.lane.b32.xlu0 %v896, 80
        %v1073 = vpop.permute.xlu0 %1072
        %1074 = vrot.lane.b32.xlu0 %v899, 80
        %v1075 = vpop.permute.xlu0 %1074
        %1076 = vrot.lane.b32.xlu0 %v902, 80
        %v1077 = vpop.permute.xlu0 %1076
        %1078 = vrot.lane.b32.xlu0 %v919, 80
        %v1079 = vpop.permute.xlu0 %1078
        %1080 = vrot.lane.b32.xlu0 %v604, 96
        %v1081 = vpop.permute.xlu0 %1080
        %1082 = vrot.lane.b32.xlu0 %v605, 96
        %v1083 = vpop.permute.xlu0 %1082
        %1084 = vrot.lane.b32.xlu0 %v606, 96
        %v1085 = vpop.permute.xlu0 %1084
        %1086 = vrot.lane.b32.xlu0 %v607, 96
        %v1087 = vpop.permute.xlu0 %1086
        %1088 = vrot.lane.b32.xlu0 %v608, 96
        %v1089 = vpop.permute.xlu0 %1088
        %1090 = vrot.lane.b32.xlu0 %v609, 96
        %v1091 = vpop.permute.xlu0 %1090
        %1092 = vrot.lane.b32.xlu0 %v610, 96
        %v1093 = vpop.permute.xlu0 %1092
        %1094 = vrot.lane.b32.xlu0 %v611, 96
        %v1095 = vpop.permute.xlu0 %1094
        %1096 = vrot.lane.b32.xlu0 %v612, 96
        %v1097 = vpop.permute.xlu0 %1096
        %1098 = vrot.lane.b32.xlu0 %v613, 96
        %v1099 = vpop.permute.xlu0 %1098
        %1100 = vrot.lane.b32.xlu0 %v614, 96
        %v1101 = vpop.permute.xlu0 %1100
        %1102 = vrot.lane.b32.xlu0 %v615, 96
        %v1103 = vpop.permute.xlu0 %1102
        %1104 = vrot.lane.b32.xlu0 %v616, 96
        %v1105 = vpop.permute.xlu0 %1104
        %1106 = vrot.lane.b32.xlu0 %v617, 96
        %v1107 = vpop.permute.xlu0 %1106
        %1108 = vrot.lane.b32.xlu0 %v618, 96
        %v1109 = vpop.permute.xlu0 %1108
        %1110 = vrot.lane.b32.xlu0 0, 96
        %v1111 = vpop.permute.xlu0 %1110
        %1112 = vrot.lane.b32.xlu0 %v667, 112
        %v1113 = vpop.permute.xlu0 %1112
        %1114 = vrot.lane.b32.xlu0 %v679, 112
        %v1115 = vpop.permute.xlu0 %1114
        %1116 = vrot.lane.b32.xlu0 %v691, 112
        %v1117 = vpop.permute.xlu0 %1116
        %1118 = vrot.lane.b32.xlu0 %v703, 112
        %v1119 = vpop.permute.xlu0 %1118
        %1120 = vrot.lane.b32.xlu0 %v715, 112
        %v1121 = vpop.permute.xlu0 %1120
        %1122 = vrot.lane.b32.xlu0 %v727, 112
        %v1123 = vpop.permute.xlu0 %1122
        %1124 = vrot.lane.b32.xlu0 %v739, 112
        %v1125 = vpop.permute.xlu0 %1124
        %1126 = vrot.lane.b32.xlu0 %v751, 112
        %v1127 = vpop.permute.xlu0 %1126
        %1128 = vrot.lane.b32.xlu0 %v763, 112
        %v1129 = vpop.permute.xlu0 %1128
        %1130 = vrot.lane.b32.xlu0 %v775, 112
        %v1131 = vpop.permute.xlu0 %1130
        %1132 = vrot.lane.b32.xlu0 %v787, 112
        %v1133 = vpop.permute.xlu0 %1132
        %1134 = vrot.lane.b32.xlu0 %v799, 112
        %v1135 = vpop.permute.xlu0 %1134
        %1136 = vrot.lane.b32.xlu0 %v811, 112
        %v1137 = vpop.permute.xlu0 %1136
        %1138 = vrot.lane.b32.xlu0 %v823, 112
        %v1139 = vpop.permute.xlu0 %1138
        %1140 = vrot.lane.b32.xlu0 %v914, 112
        %v1141 = vpop.permute.xlu0 %1140
        %1142 = vrot.lane.b32.xlu0 %v643, 112
        %v1143 = vpop.permute.xlu0 %1142
        %vm1144 = vcmask 130048
        %v1146 = vsel %vm1144, 0, %v921
        %v1148 = vsel %vm1144, %v603, %v923
        %v1150 = vsel %vm1144, %v604, %v925
        %v1152 = vsel %vm1144, %v605, %v927
        %v1154 = vsel %vm1144, %v606, %v929
        %v1156 = vsel %vm1144, %v607, %v931
        %v1158 = vsel %vm1144, %v608, %v933
        %v1160 = vsel %vm1144, %v609, %v935
        %v1162 = vsel %vm1144, %v610, %v937
        %v1164 = vsel %vm1144, %v611, %v939
        %v1166 = vsel %vm1144, %v612, %v941
        %v1168 = vsel %vm1144, %v613, %v943
        %v1170 = vsel %vm1144, %v614, %v945
        %v1172 = vsel %vm1144, %v615, %v947
        %v1174 = vsel %vm1144, %v616, %v949
        %v1176 = vsel %vm1144, %v617, %v951
        %vm1177 = vcmask 261120
        %v1179 = vsel %vm1177, %v1146, %v953
        %v1181 = vsel %vm1177, %v1148, %v955
        %v1183 = vsel %vm1177, %v1150, %v957
        %v1185 = vsel %vm1177, %v1152, %v959
        %v1187 = vsel %vm1177, %v1154, %v961
        %v1189 = vsel %vm1177, %v1156, %v963
        %v1191 = vsel %vm1177, %v1158, %v965
        %v1193 = vsel %vm1177, %v1160, %v967
        %v1195 = vsel %vm1177, %v1162, %v969
        %v1197 = vsel %vm1177, %v1164, %v971
        %v1199 = vsel %vm1177, %v1166, %v973
        %v1201 = vsel %vm1177, %v1168, %v975
        %v1203 = vsel %vm1177, %v1170, %v977
        %v1205 = vsel %vm1177, %v1172, %v979
        %v1207 = vsel %vm1177, %v1174, %v981
        %v1209 = vsel %vm1177, %v1176, %v983
        %vm1210 = vcmask 392192
        %v1212 = vsel %vm1210, %v1179, %v985
        %v1214 = vsel %vm1210, %v1181, %v987
        %v1216 = vsel %vm1210, %v1183, %v989
        %v1218 = vsel %vm1210, %v1185, %v991
        %v1220 = vsel %vm1210, %v1187, %v993
        %v1222 = vsel %vm1210, %v1189, %v995
        %v1224 = vsel %vm1210, %v1191, %v997
        %v1226 = vsel %vm1210, %v1193, %v999
        %v1228 = vsel %vm1210, %v1195, %v1001
        %v1230 = vsel %vm1210, %v1197, %v1003
        %v1232 = vsel %vm1210, %v1199, %v1005
        %v1234 = vsel %vm1210, %v1201, %v1007
        %v1236 = vsel %vm1210, %v1203, %v1009
        %v1238 = vsel %vm1210, %v1205, %v1011
        %v1240 = vsel %vm1210, %v1207, %v1013
        %v1242 = vsel %vm1210, %v1209, %v1015
        %vm1243 = vcmask 523264
        %v1245 = vsel %vm1243, %v1212, %v1017
        %v1247 = vsel %vm1243, %v1214, %v1019
        %v1249 = vsel %vm1243, %v1216, %v1021
        %v1251 = vsel %vm1243, %v1218, %v1023
        %v1253 = vsel %vm1243, %v1220, %v1025
        %v1255 = vsel %vm1243, %v1222, %v1027
        %v1257 = vsel %vm1243, %v1224, %v1029
        %v1259 = vsel %vm1243, %v1226, %v1031
        %v1261 = vsel %vm1243, %v1228, %v1033
        %v1263 = vsel %vm1243, %v1230, %v1035
        %v1265 = vsel %vm1243, %v1232, %v1037
        %v1267 = vsel %vm1243, %v1234, %v1039
        %v1269 = vsel %vm1243, %v1236, %v1041
        %v1271 = vsel %vm1243, %v1238, %v1043
        %v1273 = vsel %vm1243, %v1240, %v1045
        %v1275 = vsel %vm1243, %v1242, %v1047
        %vm1276 = vcmask 654336
        %v1278 = vsel %vm1276, %v1245, %v1049
        %v1280 = vsel %vm1276, %v1247, %v1051
        %v1282 = vsel %vm1276, %v1249, %v1053
        %v1284 = vsel %vm1276, %v1251, %v1055
        %v1286 = vsel %vm1276, %v1253, %v1057
        %v1288 = vsel %vm1276, %v1255, %v1059
        %v1290 = vsel %vm1276, %v1257, %v1061
        %v1292 = vsel %vm1276, %v1259, %v1063
        %v1294 = vsel %vm1276, %v1261, %v1065
        %v1296 = vsel %vm1276, %v1263, %v1067
        %v1298 = vsel %vm1276, %v1265, %v1069
        %v1300 = vsel %vm1276, %v1267, %v1071
        %v1302 = vsel %vm1276, %v1269, %v1073
        %v1304 = vsel %vm1276, %v1271, %v1075
        %v1306 = vsel %vm1276, %v1273, %v1077
        %v1308 = vsel %vm1276, %v1275, %v1079
        %vm1309 = vcmask 785408
        %v1311 = vsel %vm1309, %v1278, %v1081
        %v1313 = vsel %vm1309, %v1280, %v1083
        %v1315 = vsel %vm1309, %v1282, %v1085
        %v1317 = vsel %vm1309, %v1284, %v1087
        %v1319 = vsel %vm1309, %v1286, %v1089
        %v1321 = vsel %vm1309, %v1288, %v1091
        %v1323 = vsel %vm1309, %v1290, %v1093
        %v1325 = vsel %vm1309, %v1292, %v1095
        %v1327 = vsel %vm1309, %v1294, %v1097
        %v1329 = vsel %vm1309, %v1296, %v1099
        %v1331 = vsel %vm1309, %v1298, %v1101
        %v1333 = vsel %vm1309, %v1300, %v1103
        %v1335 = vsel %vm1309, %v1302, %v1105
        %v1337 = vsel %vm1309, %v1304, %v1107
        %v1339 = vsel %vm1309, %v1306, %v1109
        %v1341 = vsel %vm1309, %v1308, %v1111
        %vm1342 = vcmask 916480
        %v1344 = vsel %vm1342, %v1311, %v1113
        %v1347 = vsel %vm1342, %v1313, %v1115
        %v1350 = vsel %vm1342, %v1315, %v1117
        %v1353 = vsel %vm1342, %v1317, %v1119
        %v1356 = vsel %vm1342, %v1319, %v1121
        %v1359 = vsel %vm1342, %v1321, %v1123
        %v1362 = vsel %vm1342, %v1323, %v1125
        %v1365 = vsel %vm1342, %v1325, %v1127
        %v1368 = vsel %vm1342, %v1327, %v1129
        %v1371 = vsel %vm1342, %v1329, %v1131
        %v1374 = vsel %vm1342, %v1331, %v1133
        %v1377 = vsel %vm1342, %v1333, %v1135
        %v1380 = vsel %vm1342, %v1335, %v1137
        %v1383 = vsel %vm1342, %v1337, %v1139
        %v1386 = vsel %vm1342, %v1339, %v1141
        %v1389 = vsel %vm1342, %v1341, %v1143
        %v1391 = vld [vmem:[%s3] sm:$0xf]
        %v1392 = vld [vmem:[%s3 + $0x4] sm:$0xf]
        %v1393 = vld [vmem:[%s3 + $0x8] sm:$0xf]
        %v1394 = vld [vmem:[%s3 + $0xc] sm:$0xf]
        %v1395 = vld [vmem:[%s3 + $0x10] sm:$0xf]
        %v1396 = vld [vmem:[%s3 + $0x14] sm:$0xf]
        %v1397 = vld [vmem:[%s3 + $0x18] sm:$0xf]
        %v1398 = vld [vmem:[%s3 + $0x1c] sm:$0xf]
        %v1399 = vld [vmem:[%s3 + $0x20] sm:$0xf]
        %v1400 = vld [vmem:[%s3 + $0x24] sm:$0xf]
        %v1401 = vld [vmem:[%s3 + $0x28] sm:$0xf]
        %v1402 = vld [vmem:[%s3 + $0x2c] sm:$0xf]
        %v1403 = vld [vmem:[%s3 + $0x30] sm:$0xf]
        %v1404 = vld [vmem:[%s3 + $0x34] sm:$0xf]
        %v1405 = vld [vmem:[%s3 + $0x38] sm:$0xf]
        %v1406 = vld [vmem:[%s3 + $0x3c] sm:$0xf]
        %v1407 = vld [vmem:[%s3 + $0x40] sm:$0xf]
        %v1408 = vld [vmem:[%s3 + $0x44] sm:$0xf]
        %v1427 = vunpack.c.l.b16 %v1391
        %v1428 = vunpack.c.l.b16 %v1392
        %v1429 = vunpack.c.l.b16 %v1393
        %v1430 = vunpack.c.l.b16 %v1394
        %v1431 = vunpack.c.l.b16 %v1395
        %v1432 = vunpack.c.l.b16 %v1396
        %v1433 = vunpack.c.l.b16 %v1397
        %v1434 = vunpack.c.l.b16 %v1398
        %v1435 = vunpack.c.l.b16 %v1399
        %v1436 = vunpack.c.l.b16 %v1400
        %v1437 = vunpack.c.l.b16 %v1401
        %v1438 = vunpack.c.l.b16 %v1402
        %v1439 = vunpack.c.l.b16 %v1403
        %v1440 = vunpack.c.l.b16 %v1404
        %v1441 = vunpack.c.l.b16 %v1405
        %v1442 = vunpack.c.l.b16 %v1406
        %v1443 = vunpack.c.l.b16 %v1407
        %v1444 = vunpack.c.l.b16 %v1408
        %v1445 = vpack.c.b16 %v1428, %v1427
        %v1446 = vpack.c.b16 %v1430, %v1429
        %v1447 = vpack.c.b16 %v1432, %v1431
        %v1448 = vpack.c.b16 %v1434, %v1433
        %v1449 = vpack.c.b16 %v1436, %v1435
        %v1450 = vpack.c.b16 %v1438, %v1437
        %v1451 = vpack.c.b16 %v1440, %v1439
        %v1452 = vpack.c.b16 %v1442, %v1441
        %v1453 = vpack.c.b16 %v1444, %v1443
        %v1464 = vsel %vm1144, %v863, 0
        %v1467 = vsel %vm1144, %v866, 0
        %v1470 = vsel %vm1144, %v869, 0
        %v1473 = vsel %vm1144, %v872, 0
        %v1476 = vsel %vm1144, %v875, 0
        %v1479 = vsel %vm1144, %v878, 0
        %v1482 = vsel %vm1144, %v881, 0
        %v1485 = vsel %vm1144, %v884, 0
        %v1488 = vsel %vm1144, %v887, 0
        %v1491 = vsel %vm1144, %v890, 0
        %v1494 = vsel %vm1144, %v893, 0
        %v1497 = vsel %vm1144, %v896, 0
        %v1500 = vsel %vm1144, %v899, 0
        %v1503 = vsel %vm1144, %v902, 0
        %v1506 = vsel %vm1144, %v919, 0
        %v1509 = vsel %vm1144, %v857, 0
        %1511 = vmatprep.subr.bf16.mxu0 0
        %1512 = vmatpush1.bf16.msra.mxu0 %v1445
        %1513 = vmatprep.subr.bf16.mxu0 0
        %1514 = vmatpush1.bf16.msra.mxu0 %v1446
        %1515 = vmatprep.subr.bf16.mxu0 0
        %1516 = vmatpush1.bf16.msra.mxu0 %v1447
        %1517 = vmatprep.subr.bf16.mxu0 0
        %1518 = vmatpush1.bf16.msra.mxu0 %v1448
        %1519 = vmatprep.subr.bf16.mxu0 0
        %1520 = vmatpush1.bf16.msra.mxu0 %v1449
        %1521 = vmatprep.subr.bf16.mxu0 0
        %1522 = vmatpush1.bf16.msra.mxu0 %v1450
        %1523 = vmatprep.subr.bf16.mxu0 0
        %1524 = vmatpush1.bf16.msra.mxu0 %v1451
        %1525 = vmatprep.subr.bf16.mxu0 0
        %1526 = vmatpush1.bf16.msra.mxu0 %v1452
        %1527 = vmatprep.subr.bf16.mxu0 0
        %1528 = vmatpush1.bf16.msra.mxu0 %v1453
        %1529 = vmatprep.subr.bf16.mxu0 0
        %1530 = vmatpush1.bf16.msra.mxu0 0
        %1531 = vmatprep.subr.bf16.mxu0 0
        %1532 = vmatpush1.bf16.msra.mxu0 0
        %1533 = vmatprep.subr.bf16.mxu0 0
        %1534 = vmatpush1.bf16.msra.mxu0 0
        %1535 = vmatprep.subr.bf16.mxu0 0
        %1536 = vmatpush1.bf16.msra.mxu0 0
        %1537 = vmatprep.subr.bf16.mxu0 0
        %1538 = vmatpush1.bf16.msra.mxu0 0
        %1539 = vmatprep.subr.bf16.mxu0 0
        %1540 = vmatpush1.bf16.msra.mxu0 0
        %1541 = vmatprep.subr.bf16.mxu0 0
        %1542 = vmatpush1.bf16.msra.mxu0 0
        %1543 = vmatprep.mubr.bf16.mxu0 %v1464
        %1544 = vmatmul.mubr.bf16.gmra.mrb[0].mxu0 %v1344
        %v1545 = vpop.f32.mrb[0].mxu0
        %v1546 = vadd.f32 0.0, %v1545
        %v1547 = vpop.f32.mrb[0].mxu0
        %v1548 = vpop.f32.mrb[0].mxu0
        %v1549 = vadd.f32 0.0, %v1548
        %v1550 = vpop.f32.mrb[0].mxu0
        %1551 = vmatprep.mubr.bf16.mxu0 %v1467
        %1552 = vmatmul.mubr.bf16.gmra.mrb[0].mxu0 %v1347
        %v1553 = vpop.f32.mrb[0].mxu0
        %v1554 = vadd.f32 0.0, %v1553
        %v1555 = vpop.f32.mrb[0].mxu0
        %v1556 = vpop.f32.mrb[0].mxu0
        %v1557 = vadd.f32 0.0, %v1556
        %v1558 = vpop.f32.mrb[0].mxu0
        %1559 = vmatprep.mubr.bf16.mxu0 %v1470
        %1560 = vmatmul.mubr.bf16.gmra.mrb[0].mxu0 %v1350
        %v1561 = vpop.f32.mrb[0].mxu0
        %v1562 = vadd.f32 0.0, %v1561
        %v1563 = vpop.f32.mrb[0].mxu0
        %v1564 = vpop.f32.mrb[0].mxu0
        %v1565 = vadd.f32 0.0, %v1564
        %v1566 = vpop.f32.mrb[0].mxu0
        %1567 = vmatprep.mubr.bf16.mxu0 %v1473
        %1568 = vmatmul.mubr.bf16.gmra.mrb[0].mxu0 %v1353
        %v1569 = vpop.f32.mrb[0].mxu0
        %v1570 = vadd.f32 0.0, %v1569
        %v1571 = vpop.f32.mrb[0].mxu0
        %v1572 = vpop.f32.mrb[0].mxu0
        %v1573 = vadd.f32 0.0, %v1572
        %v1574 = vpop.f32.mrb[0].mxu0
        %1575 = vmatprep.mubr.bf16.mxu0 %v1476
        %1576 = vmatmul.mubr.bf16.gmra.mrb[0].mxu0 %v1356
        %v1577 = vpop.f32.mrb[0].mxu0
        %v1578 = vadd.f32 0.0, %v1577
        %v1579 = vpop.f32.mrb[0].mxu0
        %v1580 = vpop.f32.mrb[0].mxu0
        %v1581 = vadd.f32 0.0, %v1580
        %v1582 = vpop.f32.mrb[0].mxu0
        %1583 = vmatprep.mubr.bf16.mxu0 %v1479
        %1584 = vmatmul.mubr.bf16.gmra.mrb[0].mxu0 %v1359
        %v1585 = vpop.f32.mrb[0].mxu0
        %v1586 = vadd.f32 0.0, %v1585
        %v1587 = vpop.f32.mrb[0].mxu0
        %v1588 = vpop.f32.mrb[0].mxu0
        %v1589 = vadd.f32 0.0, %v1588
        %v1590 = vpop.f32.mrb[0].mxu0
        %1591 = vmatprep.mubr.bf16.mxu0 %v1482
        %1592 = vmatmul.mubr.bf16.gmra.mrb[0].mxu0 %v1362
        %v1593 = vpop.f32.mrb[0].mxu0
        %v1594 = vadd.f32 0.0, %v1593
        %v1595 = vpop.f32.mrb[0].mxu0
        %v1596 = vpop.f32.mrb[0].mxu0
        %v1597 = vadd.f32 0.0, %v1596
        %v1598 = vpop.f32.mrb[0].mxu0
        %1599 = vmatprep.mubr.bf16.mxu0 %v1485
        %1600 = vmatmul.mubr.bf16.gmra.mrb[0].mxu0 %v1365
        %v1601 = vpop.f32.mrb[0].mxu0
        %v1602 = vadd.f32 0.0, %v1601
        %v1603 = vpop.f32.mrb[0].mxu0
        %v1604 = vpop.f32.mrb[0].mxu0
        %v1605 = vadd.f32 0.0, %v1604
        %v1606 = vpop.f32.mrb[0].mxu0
        %1607 = vmatprep.mubr.bf16.mxu0 %v1488
        %1608 = vmatmul.mubr.bf16.gmra.mrb[0].mxu0 %v1368
        %v1609 = vpop.f32.mrb[0].mxu0
        %v1610 = vadd.f32 0.0, %v1609
        %v1611 = vpop.f32.mrb[0].mxu0
        %v1612 = vpop.f32.mrb[0].mxu0
        %v1613 = vadd.f32 0.0, %v1612
        %v1614 = vpop.f32.mrb[0].mxu0
        %1615 = vmatprep.mubr.bf16.mxu0 %v1491
        %1616 = vmatmul.mubr.bf16.gmra.mrb[0].mxu0 %v1371
        %v1617 = vpop.f32.mrb[0].mxu0
        %v1618 = vadd.f32 0.0, %v1617
        %v1619 = vpop.f32.mrb[0].mxu0
        %v1620 = vpop.f32.mrb[0].mxu0
        %v1621 = vadd.f32 0.0, %v1620
        %v1622 = vpop.f32.mrb[0].mxu0
        %1623 = vmatprep.mubr.bf16.mxu0 %v1494
        %1624 = vmatmul.mubr.bf16.gmra.mrb[0].mxu0 %v1374
        %v1625 = vpop.f32.mrb[0].mxu0
        %v1626 = vadd.f32 0.0, %v1625
        %v1627 = vpop.f32.mrb[0].mxu0
        %v1628 = vpop.f32.mrb[0].mxu0
        %v1629 = vadd.f32 0.0, %v1628
        %v1630 = vpop.f32.mrb[0].mxu0
        %1631 = vmatprep.mubr.bf16.mxu0 %v1497
        %1632 = vmatmul.mubr.bf16.gmra.mrb[0].mxu0 %v1377
        %v1633 = vpop.f32.mrb[0].mxu0
        %v1634 = vadd.f32 0.0, %v1633
        %v1635 = vpop.f32.mrb[0].mxu0
        %v1636 = vpop.f32.mrb[0].mxu0
        %v1637 = vadd.f32 0.0, %v1636
        %v1638 = vpop.f32.mrb[0].mxu0
        %1639 = vmatprep.mubr.bf16.mxu0 %v1500
        %1640 = vmatmul.mubr.bf16.gmra.mrb[0].mxu0 %v1380
        %v1641 = vpop.f32.mrb[0].mxu0
        %v1642 = vadd.f32 0.0, %v1641
        %v1643 = vpop.f32.mrb[0].mxu0
        %v1644 = vpop.f32.mrb[0].mxu0
        %v1645 = vadd.f32 0.0, %v1644
        %v1646 = vpop.f32.mrb[0].mxu0
        %1647 = vmatprep.mubr.bf16.mxu0 %v1503
        %1648 = vmatmul.mubr.bf16.gmra.mrb[0].mxu0 %v1383
        %v1649 = vpop.f32.mrb[0].mxu0
        %v1650 = vadd.f32 0.0, %v1649
        %v1651 = vpop.f32.mrb[0].mxu0
        %v1652 = vpop.f32.mrb[0].mxu0
        %v1653 = vadd.f32 0.0, %v1652
        %v1654 = vpop.f32.mrb[0].mxu0
        %1655 = vmatprep.mubr.bf16.mxu0 %v1506
        %1656 = vmatmul.mubr.bf16.gmra.mrb[0].mxu0 %v1386
        %v1657 = vpop.f32.mrb[0].mxu0
        %v1658 = vadd.f32 0.0, %v1657
        %v1659 = vpop.f32.mrb[0].mxu0
        %v1660 = vpop.f32.mrb[0].mxu0
        %v1661 = vadd.f32 0.0, %v1660
        %v1662 = vpop.f32.mrb[0].mxu0
        %1663 = vmatprep.mubr.bf16.mxu0 %v1509
        %1664 = vmatmul.mubr.bf16.gmra.mrb[0].mxu0 %v1389
        %v1665 = vpop.f32.mrb[0].mxu0
        %v1666 = vadd.f32 0.0, %v1665
        %v1667 = vpop.f32.mrb[0].mxu0
        %v1668 = vpop.f32.mrb[0].mxu0
        %v1669 = vadd.f32 0.0, %v1668
        %v1670 = vpop.f32.mrb[0].mxu0
        %1671 = vdwg.mxu0
        %v1672 = vld [vmem:[%s4] sm:$0x1]
        %v1674 = vlaneseq
        %v1675 = vshrl.u32 %v1674, 7
        %v1676 = vsub.s32 0, %v1675
        %v1677 = vrot.slane %v1672, %v1676
        %v1679 = vmul.f32 %v1546, %v1677
        %v1680 = vmul.f32 %v1549, %v1677
        %v1681 = vmul.f32 %v1554, %v1677
        %v1682 = vmul.f32 %v1557, %v1677
        %v1683 = vmul.f32 %v1562, %v1677
        %v1684 = vmul.f32 %v1565, %v1677
        %v1685 = vmul.f32 %v1570, %v1677
        %v1686 = vmul.f32 %v1573, %v1677
        %v1687 = vmul.f32 %v1578, %v1677
        %v1688 = vmul.f32 %v1581, %v1677
        %v1689 = vmul.f32 %v1586, %v1677
        %v1690 = vmul.f32 %v1589, %v1677
        %v1691 = vmul.f32 %v1594, %v1677
        %v1692 = vmul.f32 %v1597, %v1677
        %v1693 = vmul.f32 %v1602, %v1677
        %v1694 = vmul.f32 %v1605, %v1677
        %v1695 = vmul.f32 %v1610, %v1677
        %v1696 = vmul.f32 %v1613, %v1677
        %v1697 = vmul.f32 %v1618, %v1677
        %v1698 = vmul.f32 %v1621, %v1677
        %v1699 = vmul.f32 %v1626, %v1677
        %v1700 = vmul.f32 %v1629, %v1677
        %v1701 = vmul.f32 %v1634, %v1677
        %v1702 = vmul.f32 %v1637, %v1677
        %v1703 = vmul.f32 %v1642, %v1677
        %v1704 = vmul.f32 %v1645, %v1677
        %v1705 = vmul.f32 %v1650, %v1677
        %v1706 = vmul.f32 %v1653, %v1677
        %v1707 = vmul.f32 %v1658, %v1677
        %v1708 = vmul.f32 %v1661, %v1677
        %v1709 = vmul.f32 %v1666, %v1677
        %v1710 = vmul.f32 %v1669, %v1677
        %v1711 = vld [vmem:[%s5] sm:$0x1]
        %v1713 = vlaneseq
        %v1714 = vshrl.u32 %v1713, 7
        %v1715 = vsub.s32 0, %v1714
        %v1716 = vrot.slane %v1711, %v1715
        %v1718 = vadd.f32 %v1679, %v1716
        %v1719 = vadd.f32 %v1680, %v1716
        %v1720 = vadd.f32 %v1681, %v1716
        %v1721 = vadd.f32 %v1682, %v1716
        %v1722 = vadd.f32 %v1683, %v1716
        %v1723 = vadd.f32 %v1684, %v1716
        %v1724 = vadd.f32 %v1685, %v1716
        %v1725 = vadd.f32 %v1686, %v1716
        %v1726 = vadd.f32 %v1687, %v1716
        %v1727 = vadd.f32 %v1688, %v1716
        %v1728 = vadd.f32 %v1689, %v1716
        %v1729 = vadd.f32 %v1690, %v1716
        %v1730 = vadd.f32 %v1691, %v1716
        %v1731 = vadd.f32 %v1692, %v1716
        %v1732 = vadd.f32 %v1693, %v1716
        %v1733 = vadd.f32 %v1694, %v1716
        %v1734 = vadd.f32 %v1695, %v1716
        %v1735 = vadd.f32 %v1696, %v1716
        %v1736 = vadd.f32 %v1697, %v1716
        %v1737 = vadd.f32 %v1698, %v1716
        %v1738 = vadd.f32 %v1699, %v1716
        %v1739 = vadd.f32 %v1700, %v1716
        %v1740 = vadd.f32 %v1701, %v1716
        %v1741 = vadd.f32 %v1702, %v1716
        %v1742 = vadd.f32 %v1703, %v1716
        %v1743 = vadd.f32 %v1704, %v1716
        %v1744 = vadd.f32 %v1705, %v1716
        %v1745 = vadd.f32 %v1706, %v1716
        %v1746 = vadd.f32 %v1707, %v1716
        %v1747 = vadd.f32 %v1708, %v1716
        %v1748 = vadd.f32 %v1709, %v1716
        %v1749 = vadd.f32 %v1710, %v1716
        %v1750 = vmax.f32 %v1718, 0.0
        %v1751 = vmax.f32 %v1719, 0.0
        %v1752 = vmax.f32 %v1720, 0.0
        %v1753 = vmax.f32 %v1721, 0.0
        %v1754 = vmax.f32 %v1722, 0.0
        %v1755 = vmax.f32 %v1723, 0.0
        %v1756 = vmax.f32 %v1724, 0.0
        %v1757 = vmax.f32 %v1725, 0.0
        %v1758 = vmax.f32 %v1726, 0.0
        %v1759 = vmax.f32 %v1727, 0.0
        %v1760 = vmax.f32 %v1728, 0.0
        %v1761 = vmax.f32 %v1729, 0.0
        %v1762 = vmax.f32 %v1730, 0.0
        %v1763 = vmax.f32 %v1731, 0.0
        %v1764 = vmax.f32 %v1732, 0.0
        %v1765 = vmax.f32 %v1733, 0.0
        %v1766 = vmax.f32 %v1734, 0.0
        %v1767 = vmax.f32 %v1735, 0.0
        %v1768 = vmax.f32 %v1736, 0.0
        %v1769 = vmax.f32 %v1737, 0.0
        %v1770 = vmax.f32 %v1738, 0.0
        %v1771 = vmax.f32 %v1739, 0.0
        %v1772 = vmax.f32 %v1740, 0.0
        %v1773 = vmax.f32 %v1741, 0.0
        %v1774 = vmax.f32 %v1742, 0.0
        %v1775 = vmax.f32 %v1743, 0.0
        %v1776 = vmax.f32 %v1744, 0.0
        %v1777 = vmax.f32 %v1745, 0.0
        %v1778 = vmax.f32 %v1746, 0.0
        %v1779 = vmax.f32 %v1747, 0.0
        %v1780 = vmax.f32 %v1748, 0.0
        %v1781 = vmax.f32 %v1749, 0.0
        %v1782 = vpack.c.bf16 %v1751, %v1750
        %v1783 = vpack.c.bf16 %v1753, %v1752
        %v1784 = vpack.c.bf16 %v1755, %v1754
        %v1785 = vpack.c.bf16 %v1757, %v1756
        %v1786 = vpack.c.bf16 %v1759, %v1758
        %v1787 = vpack.c.bf16 %v1761, %v1760
        %v1788 = vpack.c.bf16 %v1763, %v1762
        %v1789 = vpack.c.bf16 %v1765, %v1764
        %v1790 = vpack.c.bf16 %v1767, %v1766
        %v1791 = vpack.c.bf16 %v1769, %v1768
        %v1792 = vpack.c.bf16 %v1771, %v1770
        %v1793 = vpack.c.bf16 %v1773, %v1772
        %v1794 = vpack.c.bf16 %v1775, %v1774
        %v1795 = vpack.c.bf16 %v1777, %v1776
        %v1796 = vpack.c.bf16 %v1779, %v1778
        %v1797 = vpack.c.bf16 %v1781, %v1780
        %v1799 = vshrl.u32 %v1782, 16
        %v1801 = vrot.slane %v1799, 7
        %v1802 = vshll.u32 %v1782, 16
        %v1804 = vor.u32 %v1801, %v1802
        %v1806 = vshrl.u32 %v1783, 16
        %v1808 = vrot.slane %v1806, 7
        %v1809 = vshll.u32 %v1783, 16
        %v1811 = vor.u32 %v1808, %v1809
        %v1813 = vshrl.u32 %v1784, 16
        %v1815 = vrot.slane %v1813, 7
        %v1816 = vshll.u32 %v1784, 16
        %v1818 = vor.u32 %v1815, %v1816
        %v1820 = vshrl.u32 %v1785, 16
        %v1822 = vrot.slane %v1820, 7
        %v1823 = vshll.u32 %v1785, 16
        %v1825 = vor.u32 %v1822, %v1823
        %v1827 = vshrl.u32 %v1786, 16
        %v1829 = vrot.slane %v1827, 7
        %v1830 = vshll.u32 %v1786, 16
        %v1832 = vor.u32 %v1829, %v1830
        %v1834 = vshrl.u32 %v1787, 16
        %v1836 = vrot.slane %v1834, 7
        %v1837 = vshll.u32 %v1787, 16
        %v1839 = vor.u32 %v1836, %v1837
        %v1841 = vshrl.u32 %v1788, 16
        %v1843 = vrot.slane %v1841, 7
        %v1844 = vshll.u32 %v1788, 16
        %v1846 = vor.u32 %v1843, %v1844
        %v1848 = vshrl.u32 %v1789, 16
        %v1850 = vrot.slane %v1848, 7
        %v1851 = vshll.u32 %v1789, 16
        %v1853 = vor.u32 %v1850, %v1851
        %v1855 = vshrl.u32 %v1790, 16
        %v1857 = vrot.slane %v1855, 7
        %v1858 = vshll.u32 %v1790, 16
        %v1860 = vor.u32 %v1857, %v1858
        %v1862 = vshrl.u32 %v1791, 16
        %v1864 = vrot.slane %v1862, 7
        %v1865 = vshll.u32 %v1791, 16
        %v1867 = vor.u32 %v1864, %v1865
        %v1869 = vshrl.u32 %v1792, 16
        %v1871 = vrot.slane %v1869, 7
        %v1872 = vshll.u32 %v1792, 16
        %v1874 = vor.u32 %v1871, %v1872
        %v1876 = vshrl.u32 %v1793, 16
        %v1878 = vrot.slane %v1876, 7
        %v1879 = vshll.u32 %v1793, 16
        %v1881 = vor.u32 %v1878, %v1879
        %v1883 = vshrl.u32 %v1794, 16
        %v1885 = vrot.slane %v1883, 7
        %v1886 = vshll.u32 %v1794, 16
        %v1888 = vor.u32 %v1885, %v1886
        %v1890 = vshrl.u32 %v1795, 16
        %v1892 = vrot.slane %v1890, 7
        %v1893 = vshll.u32 %v1795, 16
        %v1895 = vor.u32 %v1892, %v1893
        %v1897 = vshrl.u32 %v1796, 16
        %v1899 = vrot.slane %v1897, 7
        %v1900 = vshll.u32 %v1796, 16
        %v1902 = vor.u32 %v1899, %v1900
        %v1904 = vshrl.u32 %v1797, 16
        %v1906 = vrot.slane %v1904, 7
        %v1907 = vshll.u32 %v1797, 16
        %v1909 = vor.u32 %v1906, %v1907
        %v1942 = vsel %vm602, 0, %v1804
        %v1943 = vsel %vm602, 0, %v1811
        %v1944 = vsel %vm602, 0, %v1818
        %v1945 = vsel %vm602, 0, %v1825
        %v1946 = vsel %vm602, 0, %v1832
        %v1947 = vsel %vm602, 0, %v1839
        %v1948 = vsel %vm602, 0, %v1846
        %v1949 = vsel %vm602, 0, %v1853
        %v1950 = vsel %vm602, 0, %v1860
        %v1951 = vsel %vm602, 0, %v1867
        %v1952 = vsel %vm602, 0, %v1874
        %v1953 = vsel %vm602, 0, %v1881
        %v1954 = vsel %vm602, 0, %v1888
        %v1955 = vsel %vm602, 0, %v1895
        %v1956 = vsel %vm602, 0, %v1902
        %v1957 = vsel %vm602, 0, %v1909
        %v1958 = vsel %vm602, %v1801, 0
        %v1959 = vsel %vm602, %v1808, 0
        %v1960 = vsel %vm602, %v1815, 0
        %v1961 = vsel %vm602, %v1822, 0
        %v1962 = vsel %vm602, %v1829, 0
        %v1963 = vsel %vm602, %v1836, 0
        %v1964 = vsel %vm602, %v1843, 0
        %v1965 = vsel %vm602, %v1850, 0
        %v1966 = vsel %vm602, %v1857, 0
        %v1967 = vsel %vm602, %v1864, 0
        %v1968 = vsel %vm602, %v1871, 0
        %v1969 = vsel %vm602, %v1878, 0
        %v1970 = vsel %vm602, %v1885, 0
        %v1971 = vsel %vm602, %v1892, 0
        %v1972 = vsel %vm602, %v1899, 0
        %v1973 = vsel %vm602, %v1906, 0
        %v1975 = vshrl.u32 %v1942, 16
        %v1977 = vshll.u32 %v1942, 16
        %v1979 = vrot.slane %v1977, 1
        %v1980 = vor.u32 %v1975, %v1979
        %v1982 = vshll.u32 %v1958, 16
        %v1984 = vrot.slane %v1982, 1
        %v1985 = vsel %vm635, %v1980, %v1984
        %v1987 = vshrl.u32 %v1943, 16
        %v1989 = vshll.u32 %v1943, 16
        %v1991 = vrot.slane %v1989, 1
        %v1992 = vor.u32 %v1987, %v1991
        %v1994 = vshll.u32 %v1959, 16
        %v1996 = vrot.slane %v1994, 1
        %v1997 = vsel %vm635, %v1992, %v1996
        %v1999 = vshrl.u32 %v1944, 16
        %v2001 = vshll.u32 %v1944, 16
        %v2003 = vrot.slane %v2001, 1
        %v2004 = vor.u32 %v1999, %v2003
        %v2006 = vshll.u32 %v1960, 16
        %v2008 = vrot.slane %v2006, 1
        %v2009 = vsel %vm635, %v2004, %v2008
        %v2011 = vshrl.u32 %v1945, 16
        %v2013 = vshll.u32 %v1945, 16
        %v2015 = vrot.slane %v2013, 1
        %v2016 = vor.u32 %v2011, %v2015
        %v2018 = vshll.u32 %v1961, 16
        %v2020 = vrot.slane %v2018, 1
        %v2021 = vsel %vm635, %v2016, %v2020
        %v2023 = vshrl.u32 %v1946, 16
        %v2025 = vshll.u32 %v1946, 16
        %v2027 = vrot.slane %v2025, 1
        %v2028 = vor.u32 %v2023, %v2027
        %v2030 = vshll.u32 %v1962, 16
        %v2032 = vrot.slane %v2030, 1
        %v2033 = vsel %vm635, %v2028, %v2032
        %v2035 = vshrl.u32 %v1947, 16
        %v2037 = vshll.u32 %v1947, 16
        %v2039 = vrot.slane %v2037, 1
        %v2040 = vor.u32 %v2035, %v2039
        %v2042 = vshll.u32 %v1963, 16
        %v2044 = vrot.slane %v2042, 1
        %v2045 = vsel %vm635, %v2040, %v2044
        %v2047 = vshrl.u32 %v1948, 16
        %v2049 = vshll.u32 %v1948, 16
        %v2051 = vrot.slane %v2049, 1
        %v2052 = vor.u32 %v2047, %v2051
        %v2054 = vshll.u32 %v1964, 16
        %v2056 = vrot.slane %v2054, 1
        %v2057 = vsel %vm635, %v2052, %v2056
        %v2059 = vshrl.u32 %v1949, 16
        %v2061 = vshll.u32 %v1949, 16
        %v2063 = vrot.slane %v2061, 1
        %v2064 = vor.u32 %v2059, %v2063
        %v2066 = vshll.u32 %v1965, 16
        %v2068 = vrot.slane %v2066, 1
        %v2069 = vsel %vm635, %v2064, %v2068
        %v2071 = vshrl.u32 %v1950, 16
        %v2073 = vshll.u32 %v1950, 16
        %v2075 = vrot.slane %v2073, 1
        %v2076 = vor.u32 %v2071, %v2075
        %v2078 = vshll.u32 %v1966, 16
        %v2080 = vrot.slane %v2078, 1
        %v2081 = vsel %vm635, %v2076, %v2080
        %v2083 = vshrl.u32 %v1951, 16
        %v2085 = vshll.u32 %v1951, 16
        %v2087 = vrot.slane %v2085, 1
        %v2088 = vor.u32 %v2083, %v2087
        %v2090 = vshll.u32 %v1967, 16
        %v2092 = vrot.slane %v2090, 1
        %v2093 = vsel %vm635, %v2088, %v2092
        %v2095 = vshrl.u32 %v1952, 16
        %v2097 = vshll.u32 %v1952, 16
        %v2099 = vrot.slane %v2097, 1
        %v2100 = vor.u32 %v2095, %v2099
        %v2102 = vshll.u32 %v1968, 16
        %v2104 = vrot.slane %v2102, 1
        %v2105 = vsel %vm635, %v2100, %v2104
        %v2107 = vshrl.u32 %v1953, 16
        %v2109 = vshll.u32 %v1953, 16
        %v2111 = vrot.slane %v2109, 1
        %v2112 = vor.u32 %v2107, %v2111
        %v2114 = vshll.u32 %v1969, 16
        %v2116 = vrot.slane %v2114, 1
        %v2117 = vsel %vm635, %v2112, %v2116
        %v2119 = vshrl.u32 %v1954, 16
        %v2121 = vshll.u32 %v1954, 16
        %v2123 = vrot.slane %v2121, 1
        %v2124 = vor.u32 %v2119, %v2123
        %v2126 = vshll.u32 %v1970, 16
        %v2128 = vrot.slane %v2126, 1
        %v2129 = vsel %vm635, %v2124, %v2128
        %v2131 = vshrl.u32 %v1955, 16
        %v2133 = vshll.u32 %v1955, 16
        %v2135 = vrot.slane %v2133, 1
        %v2136 = vor.u32 %v2131, %v2135
        %v2138 = vshll.u32 %v1971, 16
        %v2140 = vrot.slane %v2138, 1
        %v2141 = vsel %vm635, %v2136, %v2140
        %v2143 = vshrl.u32 %v1956, 16
        %v2145 = vshll.u32 %v1956, 16
        %v2147 = vrot.slane %v2145, 1
        %v2148 = vor.u32 %v2143, %v2147
        %v2150 = vshll.u32 %v1972, 16
        %v2152 = vrot.slane %v2150, 1
        %v2153 = vsel %vm635, %v2148, %v2152
        %v2184 = vrot.slane %v1942, 1
        %v2185 = vrot.slane %v1958, 1
        %v2186 = vsel %vm855, %v2184, %v2185
        %v2187 = vrot.slane %v1943, 1
        %v2188 = vrot.slane %v1959, 1
        %v2189 = vsel %vm855, %v2187, %v2188
        %v2190 = vrot.slane %v1944, 1
        %v2191 = vrot.slane %v1960, 1
        %v2192 = vsel %vm855, %v2190, %v2191
        %v2193 = vrot.slane %v1945, 1
        %v2194 = vrot.slane %v1961, 1
        %v2195 = vsel %vm855, %v2193, %v2194
        %v2196 = vrot.slane %v1946, 1
        %v2197 = vrot.slane %v1962, 1
        %v2198 = vsel %vm855, %v2196, %v2197
        %v2199 = vrot.slane %v1947, 1
        %v2200 = vrot.slane %v1963, 1
        %v2201 = vsel %vm855, %v2199, %v2200
        %v2202 = vrot.slane %v1948, 1
        %v2203 = vrot.slane %v1964, 1
        %v2204 = vsel %vm855, %v2202, %v2203
        %v2205 = vrot.slane %v1949, 1
        %v2206 = vrot.slane %v1965, 1
        %v2207 = vsel %vm855, %v2205, %v2206
        %v2208 = vrot.slane %v1950, 1
        %v2209 = vrot.slane %v1966, 1
        %v2210 = vsel %vm855, %v2208, %v2209
        %v2211 = vrot.slane %v1951, 1
        %v2212 = vrot.slane %v1967, 1
        %v2213 = vsel %vm855, %v2211, %v2212
        %v2214 = vrot.slane %v1952, 1
        %v2215 = vrot.slane %v1968, 1
        %v2216 = vsel %vm855, %v2214, %v2215
        %v2217 = vrot.slane %v1953, 1
        %v2218 = vrot.slane %v1969, 1
        %v2219 = vsel %vm855, %v2217, %v2218
        %v2220 = vrot.slane %v1954, 1
        %v2221 = vrot.slane %v1970, 1
        %v2222 = vsel %vm855, %v2220, %v2221
        %v2223 = vrot.slane %v1955, 1
        %v2224 = vrot.slane %v1971, 1
        %v2225 = vsel %vm855, %v2223, %v2224
        %v2226 = vrot.slane %v1956, 1
        %v2227 = vrot.slane %v1972, 1
        %v2228 = vsel %vm855, %v2226, %v2227
        %v2230 = vshrl.u32 %v1957, 16
        %v2232 = vshll.u32 %v1957, 16
        %v2234 = vrot.slane %v2232, 1
        %v2235 = vor.u32 %v2230, %v2234
        %v2237 = vshll.u32 %v1973, 16
        %v2239 = vrot.slane %v2237, 1
        %v2240 = vsel %vm635, %v2235, %v2239
        %v2243 = vrot.slane %v1957, 1
        %v2244 = vrot.slane %v1973, 1
        %v2245 = vsel %vm855, %v2243, %v2244
        %2246 = vrot.lane.b32.xlu0 %v1985, 16
        %v2247 = vpop.permute.xlu0 %2246
        %2248 = vrot.lane.b32.xlu0 %v1997, 16
        %v2249 = vpop.permute.xlu0 %2248
        %2250 = vrot.lane.b32.xlu0 %v2009, 16
        %v2251 = vpop.permute.xlu0 %2250
        %2252 = vrot.lane.b32.xlu0 %v2021, 16
        %v2253 = vpop.permute.xlu0 %2252
        %2254 = vrot.lane.b32.xlu0 %v2033, 16
        %v2255 = vpop.permute.xlu0 %2254
        %2256 = vrot.lane.b32.xlu0 %v2045, 16
        %v2257 = vpop.permute.xlu0 %2256
        %2258 = vrot.lane.b32.xlu0 %v2057, 16
        %v2259 = vpop.permute.xlu0 %2258
        %2260 = vrot.lane.b32.xlu0 %v2069, 16
        %v2261 = vpop.permute.xlu0 %2260
        %2262 = vrot.lane.b32.xlu0 %v2081, 16
        %v2263 = vpop.permute.xlu0 %2262
        %2264 = vrot.lane.b32.xlu0 %v2093, 16
        %v2265 = vpop.permute.xlu0 %2264
        %2266 = vrot.lane.b32.xlu0 %v2105, 16
        %v2267 = vpop.permute.xlu0 %2266
        %2268 = vrot.lane.b32.xlu0 %v2117, 16
        %v2269 = vpop.permute.xlu0 %2268
        %2270 = vrot.lane.b32.xlu0 %v2129, 16
        %v2271 = vpop.permute.xlu0 %2270
        %2272 = vrot.lane.b32.xlu0 %v2141, 16
        %v2273 = vpop.permute.xlu0 %2272
        %2274 = vrot.lane.b32.xlu0 %v2153, 16
        %v2275 = vpop.permute.xlu0 %2274
        %2276 = vrot.lane.b32.xlu0 %v2186, 32
        %v2277 = vpop.permute.xlu0 %2276
        %2278 = vrot.lane.b32.xlu0 %v2189, 32
        %v2279 = vpop.permute.xlu0 %2278
        %2280 = vrot.lane.b32.xlu0 %v2192, 32
        %v2281 = vpop.permute.xlu0 %2280
        %2282 = vrot.lane.b32.xlu0 %v2195, 32
        %v2283 = vpop.permute.xlu0 %2282
        %2284 = vrot.lane.b32.xlu0 %v2198, 32
        %v2285 = vpop.permute.xlu0 %2284
        %2286 = vrot.lane.b32.xlu0 %v2201, 32
        %v2287 = vpop.permute.xlu0 %2286
        %2288 = vrot.lane.b32.xlu0 %v2204, 32
        %v2289 = vpop.permute.xlu0 %2288
        %2290 = vrot.lane.b32.xlu0 %v2207, 32
        %v2291 = vpop.permute.xlu0 %2290
        %2292 = vrot.lane.b32.xlu0 %v2210, 32
        %v2293 = vpop.permute.xlu0 %2292
        %2294 = vrot.lane.b32.xlu0 %v2213, 32
        %v2295 = vpop.permute.xlu0 %2294
        %2296 = vrot.lane.b32.xlu0 %v2216, 32
        %v2297 = vpop.permute.xlu0 %2296
        %2298 = vrot.lane.b32.xlu0 %v2219, 32
        %v2299 = vpop.permute.xlu0 %2298
        %2300 = vrot.lane.b32.xlu0 %v2222, 32
        %v2301 = vpop.permute.xlu0 %2300
        %2302 = vrot.lane.b32.xlu0 %v2225, 32
        %v2303 = vpop.permute.xlu0 %2302
        %2304 = vrot.lane.b32.xlu0 %v2228, 32
        %v2305 = vpop.permute.xlu0 %2304
        %2306 = vrot.lane.b32.xlu0 %v1942, 48
        %v2307 = vpop.permute.xlu0 %2306
        %2308 = vrot.lane.b32.xlu0 %v1943, 48
        %v2309 = vpop.permute.xlu0 %2308
        %2310 = vrot.lane.b32.xlu0 %v1944, 48
        %v2311 = vpop.permute.xlu0 %2310
        %2312 = vrot.lane.b32.xlu0 %v1945, 48
        %v2313 = vpop.permute.xlu0 %2312
        %2314 = vrot.lane.b32.xlu0 %v1946, 48
        %v2315 = vpop.permute.xlu0 %2314
        %2316 = vrot.lane.b32.xlu0 %v1947, 48
        %v2317 = vpop.permute.xlu0 %2316
        %2318 = vrot.lane.b32.xlu0 %v1948, 48
        %v2319 = vpop.permute.xlu0 %2318
        %2320 = vrot.lane.b32.xlu0 %v1949, 48
        %v2321 = vpop.permute.xlu0 %2320
        %2322 = vrot.lane.b32.xlu0 %v1950, 48
        %v2323 = vpop.permute.xlu0 %2322
        %2324 = vrot.lane.b32.xlu0 %v1951, 48
        %v2325 = vpop.permute.xlu0 %2324
        %2326 = vrot.lane.b32.xlu0 %v1952, 48
        %v2327 = vpop.permute.xlu0 %2326
        %2328 = vrot.lane.b32.xlu0 %v1953, 48
        %v2329 = vpop.permute.xlu0 %2328
        %2330 = vrot.lane.b32.xlu0 %v1954, 48
        %v2331 = vpop.permute.xlu0 %2330
        %2332 = vrot.lane.b32.xlu0 %v1955, 48
        %v2333 = vpop.permute.xlu0 %2332
        %2334 = vrot.lane.b32.xlu0 %v1956, 48
        %v2335 = vpop.permute.xlu0 %2334
        %2336 = vrot.lane.b32.xlu0 %v1957, 48
        %v2337 = vpop.permute.xlu0 %2336
        %2338 = vrot.lane.b32.xlu0 %v1985, 64
        %v2339 = vpop.permute.xlu0 %2338
        %2340 = vrot.lane.b32.xlu0 %v1997, 64
        %v2341 = vpop.permute.xlu0 %2340
        %2342 = vrot.lane.b32.xlu0 %v2009, 64
        %v2343 = vpop.permute.xlu0 %2342
        %2344 = vrot.lane.b32.xlu0 %v2021, 64
        %v2345 = vpop.permute.xlu0 %2344
        %2346 = vrot.lane.b32.xlu0 %v2033, 64
        %v2347 = vpop.permute.xlu0 %2346
        %2348 = vrot.lane.b32.xlu0 %v2045, 64
        %v2349 = vpop.permute.xlu0 %2348
        %2350 = vrot.lane.b32.xlu0 %v2057, 64
        %v2351 = vpop.permute.xlu0 %2350
        %2352 = vrot.lane.b32.xlu0 %v2069, 64
        %v2353 = vpop.permute.xlu0 %2352
        %2354 = vrot.lane.b32.xlu0 %v2081, 64
        %v2355 = vpop.permute.xlu0 %2354
        %2356 = vrot.lane.b32.xlu0 %v2093, 64
        %v2357 = vpop.permute.xlu0 %2356
        %2358 = vrot.lane.b32.xlu0 %v2105, 64
        %v2359 = vpop.permute.xlu0 %2358
        %2360 = vrot.lane.b32.xlu0 %v2117, 64
        %v2361 = vpop.permute.xlu0 %2360
        %2362 = vrot.lane.b32.xlu0 %v2129, 64
        %v2363 = vpop.permute.xlu0 %2362
        %2364 = vrot.lane.b32.xlu0 %v2141, 64
        %v2365 = vpop.permute.xlu0 %2364
        %2366 = vrot.lane.b32.xlu0 %v2153, 64
        %v2367 = vpop.permute.xlu0 %2366
        %2368 = vrot.lane.b32.xlu0 %v2240, 64
        %v2369 = vpop.permute.xlu0 %2368
        %2370 = vrot.lane.b32.xlu0 %v2186, 80
        %v2371 = vpop.permute.xlu0 %2370
        %2372 = vrot.lane.b32.xlu0 %v2189, 80
        %v2373 = vpop.permute.xlu0 %2372
        %2374 = vrot.lane.b32.xlu0 %v2192, 80
        %v2375 = vpop.permute.xlu0 %2374
        %2376 = vrot.lane.b32.xlu0 %v2195, 80
        %v2377 = vpop.permute.xlu0 %2376
        %2378 = vrot.lane.b32.xlu0 %v2198, 80
        %v2379 = vpop.permute.xlu0 %2378
        %2380 = vrot.lane.b32.xlu0 %v2201, 80
        %v2381 = vpop.permute.xlu0 %2380
        %2382 = vrot.lane.b32.xlu0 %v2204, 80
        %v2383 = vpop.permute.xlu0 %2382
        %2384 = vrot.lane.b32.xlu0 %v2207, 80
        %v2385 = vpop.permute.xlu0 %2384
        %2386 = vrot.lane.b32.xlu0 %v2210, 80
        %v2387 = vpop.permute.xlu0 %2386
        %2388 = vrot.lane.b32.xlu0 %v2213, 80
        %v2389 = vpop.permute.xlu0 %2388
        %2390 = vrot.lane.b32.xlu0 %v2216, 80
        %v2391 = vpop.permute.xlu0 %2390
        %2392 = vrot.lane.b32.xlu0 %v2219, 80
        %v2393 = vpop.permute.xlu0 %2392
        %2394 = vrot.lane.b32.xlu0 %v2222, 80
        %v2395 = vpop.permute.xlu0 %2394
        %2396 = vrot.lane.b32.xlu0 %v2225, 80
        %v2397 = vpop.permute.xlu0 %2396
        %2398 = vrot.lane.b32.xlu0 %v2228, 80
        %v2399 = vpop.permute.xlu0 %2398
        %2400 = vrot.lane.b32.xlu0 %v2245, 80
        %v2401 = vpop.permute.xlu0 %2400
        %2402 = vrot.lane.b32.xlu0 %v1943, 96
        %v2403 = vpop.permute.xlu0 %2402
        %2404 = vrot.lane.b32.xlu0 %v1944, 96
        %v2405 = vpop.permute.xlu0 %2404
        %2406 = vrot.lane.b32.xlu0 %v1945, 96
        %v2407 = vpop.permute.xlu0 %2406
        %2408 = vrot.lane.b32.xlu0 %v1946, 96
        %v2409 = vpop.permute.xlu0 %2408
        %2410 = vrot.lane.b32.xlu0 %v1947, 96
        %v2411 = vpop.permute.xlu0 %2410
        %2412 = vrot.lane.b32.xlu0 %v1948, 96
        %v2413 = vpop.permute.xlu0 %2412
        %2414 = vrot.lane.b32.xlu0 %v1949, 96
        %v2415 = vpop.permute.xlu0 %2414
        %2416 = vrot.lane.b32.xlu0 %v1950, 96
        %v2417 = vpop.permute.xlu0 %2416
        %2418 = vrot.lane.b32.xlu0 %v1951, 96
        %v2419 = vpop.permute.xlu0 %2418
        %2420 = vrot.lane.b32.xlu0 %v1952, 96
        %v2421 = vpop.permute.xlu0 %2420
        %2422 = vrot.lane.b32.xlu0 %v1953, 96
        %v2423 = vpop.permute.xlu0 %2422
        %2424 = vrot.lane.b32.xlu0 %v1954, 96
        %v2425 = vpop.permute.xlu0 %2424
        %2426 = vrot.lane.b32.xlu0 %v1955, 96
        %v2427 = vpop.permute.xlu0 %2426
        %2428 = vrot.lane.b32.xlu0 %v1956, 96
        %v2429 = vpop.permute.xlu0 %2428
        %2430 = vrot.lane.b32.xlu0 %v1957, 96
        %v2431 = vpop.permute.xlu0 %2430
        %2432 = vrot.lane.b32.xlu0 %v1997, 112
        %v2433 = vpop.permute.xlu0 %2432
        %2434 = vrot.lane.b32.xlu0 %v2009, 112
        %v2435 = vpop.permute.xlu0 %2434
        %2436 = vrot.lane.b32.xlu0 %v2021, 112
        %v2437 = vpop.permute.xlu0 %2436
        %2438 = vrot.lane.b32.xlu0 %v2033, 112
        %v2439 = vpop.permute.xlu0 %2438
        %2440 = vrot.lane.b32.xlu0 %v2045, 112
        %v2441 = vpop.permute.xlu0 %2440
        %2442 = vrot.lane.b32.xlu0 %v2057, 112
        %v2443 = vpop.permute.xlu0 %2442
        %2444 = vrot.lane.b32.xlu0 %v2069, 112
        %v2445 = vpop.permute.xlu0 %2444
        %2446 = vrot.lane.b32.xlu0 %v2081, 112
        %v2447 = vpop.permute.xlu0 %2446
        %2448 = vrot.lane.b32.xlu0 %v2093, 112
        %v2449 = vpop.permute.xlu0 %2448
        %2450 = vrot.lane.b32.xlu0 %v2105, 112
        %v2451 = vpop.permute.xlu0 %2450
        %2452 = vrot.lane.b32.xlu0 %v2117, 112
        %v2453 = vpop.permute.xlu0 %2452
        %2454 = vrot.lane.b32.xlu0 %v2129, 112
        %v2455 = vpop.permute.xlu0 %2454
        %2456 = vrot.lane.b32.xlu0 %v2141, 112
        %v2457 = vpop.permute.xlu0 %2456
        %2458 = vrot.lane.b32.xlu0 %v2153, 112
        %v2459 = vpop.permute.xlu0 %2458
        %2460 = vrot.lane.b32.xlu0 %v2240, 112
        %v2461 = vpop.permute.xlu0 %2460
        %v2463 = vsel %vm1144, %v1942, %v2247
        %v2465 = vsel %vm1144, %v1943, %v2249
        %v2467 = vsel %vm1144, %v1944, %v2251
        %v2469 = vsel %vm1144, %v1945, %v2253
        %v2471 = vsel %vm1144, %v1946, %v2255
        %v2473 = vsel %vm1144, %v1947, %v2257
        %v2475 = vsel %vm1144, %v1948, %v2259
        %v2477 = vsel %vm1144, %v1949, %v2261
        %v2479 = vsel %vm1144, %v1950, %v2263
        %v2481 = vsel %vm1144, %v1951, %v2265
        %v2483 = vsel %vm1144, %v1952, %v2267
        %v2485 = vsel %vm1144, %v1953, %v2269
        %v2487 = vsel %vm1144, %v1954, %v2271
        %v2489 = vsel %vm1144, %v1955, %v2273
        %v2491 = vsel %vm1144, %v1956, %v2275
        %v2493 = vsel %vm1177, %v2463, %v2277
        %v2495 = vsel %vm1177, %v2465, %v2279
        %v2497 = vsel %vm1177, %v2467, %v2281
        %v2499 = vsel %vm1177, %v2469, %v2283
        %v2501 = vsel %vm1177, %v2471, %v2285
        %v2503 = vsel %vm1177, %v2473, %v2287
        %v2505 = vsel %vm1177, %v2475, %v2289
        %v2507 = vsel %vm1177, %v2477, %v2291
        %v2509 = vsel %vm1177, %v2479, %v2293
        %v2511 = vsel %vm1177, %v2481, %v2295
        %v2513 = vsel %vm1177, %v2483, %v2297
        %v2515 = vsel %vm1177, %v2485, %v2299
        %v2517 = vsel %vm1177, %v2487, %v2301
        %v2519 = vsel %vm1177, %v2489, %v2303
        %v2521 = vsel %vm1177, %v2491, %v2305
        %v2523 = vsel %vm1210, %v1179, %v2307
        %v2525 = vsel %vm1210, %v2493, %v2309
        %v2527 = vsel %vm1210, %v2495, %v2311
        %v2529 = vsel %vm1210, %v2497, %v2313
        %v2531 = vsel %vm1210, %v2499, %v2315
        %v2533 = vsel %vm1210, %v2501, %v2317
        %v2535 = vsel %vm1210, %v2503, %v2319
        %v2537 = vsel %vm1210, %v2505, %v2321
        %v2539 = vsel %vm1210, %v2507, %v2323
        %v2541 = vsel %vm1210, %v2509, %v2325
        %v2543 = vsel %vm1210, %v2511, %v2327
        %v2545 = vsel %vm1210, %v2513, %v2329
        %v2547 = vsel %vm1210, %v2515, %v2331
        %v2549 = vsel %vm1210, %v2517, %v2333
        %v2551 = vsel %vm1210, %v2519, %v2335
        %v2553 = vsel %vm1210, %v2521, %v2337
        %v2555 = vsel %vm1243, %v2523, %v2339
        %v2557 = vsel %vm1243, %v2525, %v2341
        %v2559 = vsel %vm1243, %v2527, %v2343
        %v2561 = vsel %vm1243, %v2529, %v2345
        %v2563 = vsel %vm1243, %v2531, %v2347
        %v2565 = vsel %vm1243, %v2533, %v2349
        %v2567 = vsel %vm1243, %v2535, %v2351
        %v2569 = vsel %vm1243, %v2537, %v2353
        %v2571 = vsel %vm1243, %v2539, %v2355
        %v2573 = vsel %vm1243, %v2541, %v2357
        %v2575 = vsel %vm1243, %v2543, %v2359
        %v2577 = vsel %vm1243, %v2545, %v2361
        %v2579 = vsel %vm1243, %v2547, %v2363
        %v2581 = vsel %vm1243, %v2549, %v2365
        %v2583 = vsel %vm1243, %v2551, %v2367
        %v2585 = vsel %vm1243, %v2553, %v2369
        %v2587 = vsel %vm1276, %v2555, %v2371
        %v2589 = vsel %vm1276, %v2557, %v2373
        %v2591 = vsel %vm1276, %v2559, %v2375
        %v2593 = vsel %vm1276, %v2561, %v2377
        %v2595 = vsel %vm1276, %v2563, %v2379
        %v2597 = vsel %vm1276, %v2565, %v2381
        %v2599 = vsel %vm1276, %v2567, %v2383
        %v2601 = vsel %vm1276, %v2569, %v2385
        %v2603 = vsel %vm1276, %v2571, %v2387
        %v2605 = vsel %vm1276, %v2573, %v2389
        %v2607 = vsel %vm1276, %v2575, %v2391
        %v2609 = vsel %vm1276, %v2577, %v2393
        %v2611 = vsel %vm1276, %v2579, %v2395
        %v2613 = vsel %vm1276, %v2581, %v2397
        %v2615 = vsel %vm1276, %v2583, %v2399
        %v2617 = vsel %vm1276, %v2585, %v2401
        %v2619 = vsel %vm1309, %v2587, %v2403
        %v2621 = vsel %vm1309, %v2589, %v2405
        %v2623 = vsel %vm1309, %v2591, %v2407
        %v2625 = vsel %vm1309, %v2593, %v2409
        %v2627 = vsel %vm1309, %v2595, %v2411
        %v2629 = vsel %vm1309, %v2597, %v2413
        %v2631 = vsel %vm1309, %v2599, %v2415
        %v2633 = vsel %vm1309, %v2601, %v2417
        %v2635 = vsel %vm1309, %v2603, %v2419
        %v2637 = vsel %vm1309, %v2605, %v2421
        %v2639 = vsel %vm1309, %v2607, %v2423
        %v2641 = vsel %vm1309, %v2609, %v2425
        %v2643 = vsel %vm1309, %v2611, %v2427
        %v2645 = vsel %vm1309, %v2613, %v2429
        %v2647 = vsel %vm1309, %v2615, %v2431
        %v2648 = vsel %vm1309, %v2617, %v1111
        %v2650 = vsel %vm1342, %v2619, %v2433
        %v2653 = vsel %vm1342, %v2621, %v2435
        %v2656 = vsel %vm1342, %v2623, %v2437
        %v2659 = vsel %vm1342, %v2625, %v2439
        %v2662 = vsel %vm1342, %v2627, %v2441
        %v2665 = vsel %vm1342, %v2629, %v2443
        %v2668 = vsel %vm1342, %v2631, %v2445
        %v2671 = vsel %vm1342, %v2633, %v2447
        %v2674 = vsel %vm1342, %v2635, %v2449
        %v2677 = vsel %vm1342, %v2637, %v2451
        %v2680 = vsel %vm1342, %v2639, %v2453
        %v2683 = vsel %vm1342, %v2641, %v2455
        %v2686 = vsel %vm1342, %v2643, %v2457
        %v2689 = vsel %vm1342, %v2645, %v2459
        %v2692 = vsel %vm1342, %v2647, %v2461
        %v2694 = vsel %vm1342, %v2648, %v1143
        %v2696 = vld [vmem:[%s6] sm:$0xf]
        %v2697 = vld [vmem:[%s6 + $0x4] sm:$0xf]
        %v2698 = vld [vmem:[%s6 + $0x8] sm:$0xf]
        %v2699 = vld [vmem:[%s6 + $0xc] sm:$0xf]
        %v2700 = vld [vmem:[%s6 + $0x10] sm:$0xf]
        %v2701 = vld [vmem:[%s6 + $0x14] sm:$0xf]
        %v2702 = vld [vmem:[%s6 + $0x18] sm:$0xf]
        %v2703 = vld [vmem:[%s6 + $0x1c] sm:$0xf]
        %v2704 = vld [vmem:[%s6 + $0x20] sm:$0xf]
        %v2705 = vld [vmem:[%s6 + $0x24] sm:$0xf]
        %v2706 = vld [vmem:[%s6 + $0x28] sm:$0xf]
        %v2707 = vld [vmem:[%s6 + $0x2c] sm:$0xf]
        %v2708 = vld [vmem:[%s6 + $0x30] sm:$0xf]
        %v2709 = vld [vmem:[%s6 + $0x34] sm:$0xf]
        %v2710 = vld [vmem:[%s6 + $0x38] sm:$0xf]
        %v2711 = vld [vmem:[%s6 + $0x3c] sm:$0xf]
        %v2712 = vld [vmem:[%s6 + $0x40] sm:$0xf]
        %v2713 = vld [vmem:[%s6 + $0x44] sm:$0xf]
        %v2732 = vunpack.c.l.b16 %v2696
        %v2733 = vunpack.c.l.b16 %v2697
        %v2734 = vunpack.c.l.b16 %v2698
        %v2735 = vunpack.c.l.b16 %v2699
        %v2736 = vunpack.c.l.b16 %v2700
        %v2737 = vunpack.c.l.b16 %v2701
        %v2738 = vunpack.c.l.b16 %v2702
        %v2739 = vunpack.c.l.b16 %v2703
        %v2740 = vunpack.c.l.b16 %v2704
        %v2741 = vunpack.c.l.b16 %v2705
        %v2742 = vunpack.c.l.b16 %v2706
        %v2743 = vunpack.c.l.b16 %v2707
        %v2744 = vunpack.c.l.b16 %v2708
        %v2745 = vunpack.c.l.b16 %v2709
        %v2746 = vunpack.c.l.b16 %v2710
        %v2747 = vunpack.c.l.b16 %v2711
        %v2748 = vunpack.c.l.b16 %v2712
        %v2749 = vunpack.c.l.b16 %v2713
        %v2750 = vpack.c.b16 %v2733, %v2732
        %v2751 = vpack.c.b16 %v2735, %v2734
        %v2752 = vpack.c.b16 %v2737, %v2736
        %v2753 = vpack.c.b16 %v2739, %v2738
        %v2754 = vpack.c.b16 %v2741, %v2740
        %v2755 = vpack.c.b16 %v2743, %v2742
        %v2756 = vpack.c.b16 %v2745, %v2744
        %v2757 = vpack.c.b16 %v2747, %v2746
        %v2758 = vpack.c.b16 %v2749, %v2748
        %v2769 = vsel %vm1144, %v2189, 0
        %v2772 = vsel %vm1144, %v2192, 0
        %v2775 = vsel %vm1144, %v2195, 0
        %v2778 = vsel %vm1144, %v2198, 0
        %v2781 = vsel %vm1144, %v2201, 0
        %v2784 = vsel %vm1144, %v2204, 0
        %v2787 = vsel %vm1144, %v2207, 0
        %v2790 = vsel %vm1144, %v2210, 0
        %v2793 = vsel %vm1144, %v2213, 0
        %v2796 = vsel %vm1144, %v2216, 0
        %v2799 = vsel %vm1144, %v2219, 0
        %v2802 = vsel %vm1144, %v2222, 0
        %v2805 = vsel %vm1144, %v2225, 0
        %v2808 = vsel %vm1144, %v2228, 0
        %v2811 = vsel %vm1144, %v2245, 0
        %2813 = vmatprep.subr.bf16.mxu0 0
        %2814 = vmatpush1.bf16.msra.mxu0 %v2750
        %2815 = vmatprep.subr.bf16.mxu0 0
        %2816 = vmatpush1.bf16.msra.mxu0 %v2751
        %2817 = vmatprep.subr.bf16.mxu0 0
        %2818 = vmatpush1.bf16.msra.mxu0 %v2752
        %2819 = vmatprep.subr.bf16.mxu0 0
        %2820 = vmatpush1.bf16.msra.mxu0 %v2753
        %2821 = vmatprep.subr.bf16.mxu0 0
        %2822 = vmatpush1.bf16.msra.mxu0 %v2754
        %2823 = vmatprep.subr.bf16.mxu0 0
        %2824 = vmatpush1.bf16.msra.mxu0 %v2755
        %2825 = vmatprep.subr.bf16.mxu0 0
        %2826 = vmatpush1.bf16.msra.mxu0 %v2756
        %2827 = vmatprep.subr.bf16.mxu0 0
        %2828 = vmatpush1.bf16.msra.mxu0 %v2757
        %2829 = vmatprep.subr.bf16.mxu0 0
        %2830 = vmatpush1.bf16.msra.mxu0 %v2758
        %2831 = vmatprep.subr.bf16.mxu0 0
        %2832 = vmatpush1.bf16.msra.mxu0 0
        %2833 = vmatprep.subr.bf16.mxu0 0
        %2834 = vmatpush1.bf16.msra.mxu0 0
        %2835 = vmatprep.subr.bf16.mxu0 0
        %2836 = vmatpush1.bf16.msra.mxu0 0
        %2837 = vmatprep.subr.bf16.mxu0 0
        %2838 = vmatpush1.bf16.msra.mxu0 0
        %2839 = vmatprep.subr.bf16.mxu0 0
        %2840 = vmatpush1.bf16.msra.mxu0 0
        %2841 = vmatprep.subr.bf16.mxu0 0
        %2842 = vmatpush1.bf16.msra.mxu0 0
        %2843 = vmatprep.subr.bf16.mxu0 0
        %2844 = vmatpush1.bf16.msra.mxu0 0
        %2845 = vmatprep.mubr.bf16.mxu0 %v2769
        %2846 = vmatmul.mubr.bf16.gmra.mrb[0].mxu0 %v2650
        %v2847 = vpop.f32.mrb[0].mxu0
        %v2848 = vadd.f32 0.0, %v2847
        %v2849 = vpop.f32.mrb[0].mxu0
        %v2850 = vpop.f32.mrb[0].mxu0
        %v2851 = vadd.f32 0.0, %v2850
        %v2852 = vpop.f32.mrb[0].mxu0
        %2853 = vmatprep.mubr.bf16.mxu0 %v2772
        %2854 = vmatmul.mubr.bf16.gmra.mrb[0].mxu0 %v2653
        %v2855 = vpop.f32.mrb[0].mxu0
        %v2856 = vadd.f32 0.0, %v2855
        %v2857 = vpop.f32.mrb[0].mxu0
        %v2858 = vpop.f32.mrb[0].mxu0
        %v2859 = vadd.f32 0.0, %v2858
        %v2860 = vpop.f32.mrb[0].mxu0
        %2861 = vmatprep.mubr.bf16.mxu0 %v2775
        %2862 = vmatmul.mubr.bf16.gmra.mrb[0].mxu0 %v2656
        %v2863 = vpop.f32.mrb[0].mxu0
        %v2864 = vadd.f32 0.0, %v2863
        %v2865 = vpop.f32.mrb[0].mxu0
        %v2866 = vpop.f32.mrb[0].mxu0
        %v2867 = vadd.f32 0.0, %v2866
        %v2868 = vpop.f32.mrb[0].mxu0
        %2869 = vmatprep.mubr.bf16.mxu0 %v2778
        %2870 = vmatmul.mubr.bf16.gmra.mrb[0].mxu0 %v2659
        %v2871 = vpop.f32.mrb[0].mxu0
        %v2872 = vadd.f32 0.0, %v2871
        %v2873 = vpop.f32.mrb[0].mxu0
        %v2874 = vpop.f32.mrb[0].mxu0
        %v2875 = vadd.f32 0.0, %v2874
        %v2876 = vpop.f32.mrb[0].mxu0
        %2877 = vmatprep.mubr.bf16.mxu0 %v2781
        %2878 = vmatmul.mubr.bf16.gmra.mrb[0].mxu0 %v2662
        %v2879 = vpop.f32.mrb[0].mxu0
        %v2880 = vadd.f32 0.0, %v2879
        %v2881 = vpop.f32.mrb[0].mxu0
        %v2882 = vpop.f32.mrb[0].mxu0
        %v2883 = vadd.f32 0.0, %v2882
        %v2884 = vpop.f32.mrb[0].mxu0
        %2885 = vmatprep.mubr.bf16.mxu0 %v2784
        %2886 = vmatmul.mubr.bf16.gmra.mrb[0].mxu0 %v2665
        %v2887 = vpop.f32.mrb[0].mxu0
        %v2888 = vadd.f32 0.0, %v2887
        %v2889 = vpop.f32.mrb[0].mxu0
        %v2890 = vpop.f32.mrb[0].mxu0
        %v2891 = vadd.f32 0.0, %v2890
        %v2892 = vpop.f32.mrb[0].mxu0
        %2893 = vmatprep.mubr.bf16.mxu0 %v2787
        %2894 = vmatmul.mubr.bf16.gmra.mrb[0].mxu0 %v2668
        %v2895 = vpop.f32.mrb[0].mxu0
        %v2896 = vadd.f32 0.0, %v2895
        %v2897 = vpop.f32.mrb[0].mxu0
        %v2898 = vpop.f32.mrb[0].mxu0
        %v2899 = vadd.f32 0.0, %v2898
        %v2900 = vpop.f32.mrb[0].mxu0
        %2901 = vmatprep.mubr.bf16.mxu0 %v2790
        %2902 = vmatmul.mubr.bf16.gmra.mrb[0].mxu0 %v2671
        %v2903 = vpop.f32.mrb[0].mxu0
        %v2904 = vadd.f32 0.0, %v2903
        %v2905 = vpop.f32.mrb[0].mxu0
        %v2906 = vpop.f32.mrb[0].mxu0
        %v2907 = vadd.f32 0.0, %v2906
        %v2908 = vpop.f32.mrb[0].mxu0
        %2909 = vmatprep.mubr.bf16.mxu0 %v2793
        %2910 = vmatmul.mubr.bf16.gmra.mrb[0].mxu0 %v2674
        %v2911 = vpop.f32.mrb[0].mxu0
        %v2912 = vadd.f32 0.0, %v2911
        %v2913 = vpop.f32.mrb[0].mxu0
        %v2914 = vpop.f32.mrb[0].mxu0
        %v2915 = vadd.f32 0.0, %v2914
        %v2916 = vpop.f32.mrb[0].mxu0
        %2917 = vmatprep.mubr.bf16.mxu0 %v2796
        %2918 = vmatmul.mubr.bf16.gmra.mrb[0].mxu0 %v2677
        %v2919 = vpop.f32.mrb[0].mxu0
        %v2920 = vadd.f32 0.0, %v2919
        %v2921 = vpop.f32.mrb[0].mxu0
        %v2922 = vpop.f32.mrb[0].mxu0
        %v2923 = vadd.f32 0.0, %v2922
        %v2924 = vpop.f32.mrb[0].mxu0
        %2925 = vmatprep.mubr.bf16.mxu0 %v2799
        %2926 = vmatmul.mubr.bf16.gmra.mrb[0].mxu0 %v2680
        %v2927 = vpop.f32.mrb[0].mxu0
        %v2928 = vadd.f32 0.0, %v2927
        %v2929 = vpop.f32.mrb[0].mxu0
        %v2930 = vpop.f32.mrb[0].mxu0
        %v2931 = vadd.f32 0.0, %v2930
        %v2932 = vpop.f32.mrb[0].mxu0
        %2933 = vmatprep.mubr.bf16.mxu0 %v2802
        %2934 = vmatmul.mubr.bf16.gmra.mrb[0].mxu0 %v2683
        %v2935 = vpop.f32.mrb[0].mxu0
        %v2936 = vadd.f32 0.0, %v2935
        %v2937 = vpop.f32.mrb[0].mxu0
        %v2938 = vpop.f32.mrb[0].mxu0
        %v2939 = vadd.f32 0.0, %v2938
        %v2940 = vpop.f32.mrb[0].mxu0
        %2941 = vmatprep.mubr.bf16.mxu0 %v2805
        %2942 = vmatmul.mubr.bf16.gmra.mrb[0].mxu0 %v2686
        %v2943 = vpop.f32.mrb[0].mxu0
        %v2944 = vadd.f32 0.0, %v2943
        %v2945 = vpop.f32.mrb[0].mxu0
        %v2946 = vpop.f32.mrb[0].mxu0
        %v2947 = vadd.f32 0.0, %v2946
        %v2948 = vpop.f32.mrb[0].mxu0
        %2949 = vmatprep.mubr.bf16.mxu0 %v2808
        %2950 = vmatmul.mubr.bf16.gmra.mrb[0].mxu0 %v2689
        %v2951 = vpop.f32.mrb[0].mxu0
        %v2952 = vadd.f32 0.0, %v2951
        %v2953 = vpop.f32.mrb[0].mxu0
        %v2954 = vpop.f32.mrb[0].mxu0
        %v2955 = vadd.f32 0.0, %v2954
        %v2956 = vpop.f32.mrb[0].mxu0
        %2957 = vmatprep.mubr.bf16.mxu0 %v2811
        %2958 = vmatmul.mubr.bf16.gmra.mrb[0].mxu0 %v2692
        %v2959 = vpop.f32.mrb[0].mxu0
        %v2960 = vadd.f32 0.0, %v2959
        %v2961 = vpop.f32.mrb[0].mxu0
        %v2962 = vpop.f32.mrb[0].mxu0
        %v2963 = vadd.f32 0.0, %v2962
        %v2964 = vpop.f32.mrb[0].mxu0
        %2965 = vmatprep.mubr.bf16.mxu0 %v1509
        %2966 = vmatmul.mubr.bf16.gmra.mrb[0].mxu0 %v2694
        %v2967 = vpop.f32.mrb[0].mxu0
        %v2968 = vadd.f32 0.0, %v2967
        %v2969 = vpop.f32.mrb[0].mxu0
        %v2970 = vpop.f32.mrb[0].mxu0
        %v2971 = vadd.f32 0.0, %v2970
        %v2972 = vpop.f32.mrb[0].mxu0
        %2973 = vdwg.mxu0
        %v2974 = vadd.f32 %v298, %v2848
        %v2975 = vadd.f32 %v299, %v2851
        %v2976 = vadd.f32 %v300, %v2856
        %v2977 = vadd.f32 %v301, %v2859
        %v2978 = vadd.f32 %v302, %v2864
        %v2979 = vadd.f32 %v303, %v2867
        %v2980 = vadd.f32 %v304, %v2872
        %v2981 = vadd.f32 %v305, %v2875
        %v2982 = vadd.f32 %v306, %v2880
        %v2983 = vadd.f32 %v307, %v2883
        %v2984 = vadd.f32 %v308, %v2888
        %v2985 = vadd.f32 %v309, %v2891
        %v2986 = vadd.f32 %v310, %v2896
        %v2987 = vadd.f32 %v311, %v2899
        %v2988 = vadd.f32 %v312, %v2904
        %v2989 = vadd.f32 %v313, %v2907
        %v2990 = vadd.f32 %v314, %v2912
        %v2991 = vadd.f32 %v315, %v2915
        %v2992 = vadd.f32 %v316, %v2920
        %v2993 = vadd.f32 %v317, %v2923
        %v2994 = vadd.f32 %v318, %v2928
        %v2995 = vadd.f32 %v319, %v2931
        %v2996 = vadd.f32 %v320, %v2936
        %v2997 = vadd.f32 %v321, %v2939
        %v2998 = vadd.f32 %v322, %v2944
        %v2999 = vadd.f32 %v323, %v2947
        %v3000 = vadd.f32 %v324, %v2952
        %v3001 = vadd.f32 %v325, %v2955
        %v3002 = vadd.f32 %v326, %v2960
        %v3003 = vadd.f32 %v327, %v2963
        %v3004 = vadd.f32 %v328, %v2968
        %v3005 = vadd.f32 %v329, %v2971
        %3006 = vst.msk [vmem:[%s296] sm:$0xff] %vm1144, %v2974
        %3007 = vst.msk [vmem:[%s296 + $0x8] sm:$0xff] %vm1144, %v2975
        %3008 = vst.msk [vmem:[%s296 + $0x10] sm:$0xff] %vm1144, %v2976
        %3009 = vst.msk [vmem:[%s296 + $0x18] sm:$0xff] %vm1144, %v2977
        %3010 = vst.msk [vmem:[%s296 + $0x20] sm:$0xff] %vm1144, %v2978
        %3011 = vst.msk [vmem:[%s296 + $0x28] sm:$0xff] %vm1144, %v2979
        %3012 = vst.msk [vmem:[%s296 + $0x30] sm:$0xff] %vm1144, %v2980
        %3013 = vst.msk [vmem:[%s296 + $0x38] sm:$0xff] %vm1144, %v2981
        %3014 = vst.msk [vmem:[%s296 + $0x40] sm:$0xff] %vm1144, %v2982
        %3015 = vst.msk [vmem:[%s296 + $0x48] sm:$0xff] %vm1144, %v2983
        %3016 = vst.msk [vmem:[%s296 + $0x50] sm:$0xff] %vm1144, %v2984
        %3017 = vst.msk [vmem:[%s296 + $0x58] sm:$0xff] %vm1144, %v2985
        %3018 = vst.msk [vmem:[%s296 + $0x60] sm:$0xff] %vm1144, %v2986
        %3019 = vst.msk [vmem:[%s296 + $0x68] sm:$0xff] %vm1144, %v2987
        %3020 = vst.msk [vmem:[%s296 + $0x70] sm:$0xff] %vm1144, %v2988
        %3021 = vst.msk [vmem:[%s296 + $0x78] sm:$0xff] %vm1144, %v2989
        %3022 = vst.msk [vmem:[%s296 + $0x80] sm:$0xff] %vm1144, %v2990
        %3023 = vst.msk [vmem:[%s296 + $0x88] sm:$0xff] %vm1144, %v2991
        %3024 = vst.msk [vmem:[%s296 + $0x90] sm:$0xff] %vm1144, %v2992
        %3025 = vst.msk [vmem:[%s296 + $0x98] sm:$0xff] %vm1144, %v2993
        %3026 = vst.msk [vmem:[%s296 + $0xa0] sm:$0xff] %vm1144, %v2994
        %3027 = vst.msk [vmem:[%s296 + $0xa8] sm:$0xff] %vm1144, %v2995
        %3028 = vst.msk [vmem:[%s296 + $0xb0] sm:$0xff] %vm1144, %v2996
        %3029 = vst.msk [vmem:[%s296 + $0xb8] sm:$0xff] %vm1144, %v2997
        %3030 = vst.msk [vmem:[%s296 + $0xc0] sm:$0xff] %vm1144, %v2998
        %3031 = vst.msk [vmem:[%s296 + $0xc8] sm:$0xff] %vm1144, %v2999
        %3032 = vst.msk [vmem:[%s296 + $0xd0] sm:$0xff] %vm1144, %v3000
        %3033 = vst.msk [vmem:[%s296 + $0xd8] sm:$0xff] %vm1144, %v3001
        %3034 = vst.msk [vmem:[%s296 + $0xe0] sm:$0xff] %vm1144, %v3002
        %3035 = vst.msk [vmem:[%s296 + $0xe8] sm:$0xff] %vm1144, %v3003
        %3036 = vst.msk [vmem:[%s296 + $0xf0] sm:$0xff] %vm1144, %v3004
        %3037 = vst.msk [vmem:[%s296 + $0xf8] sm:$0xff] %vm1144, %v3005
        %s3038 = sand.u32 %s184, 1
        %s3039 = scalar_lea.sflag [#allocation4], %s3038
        %s3040 = sand.u32 %s184, 1
        %s3041 = smul.addr %s3040, 256
        %s3042 = scalar_lea.vmem [#allocation5], %s3041
        // Predicated region
        $region53: #{tpu_custom_call.1} parent=47 // pred_check
          %p3043 = pneg %p194
        $region54: #{tpu_custom_call.1} parent=47 // pred_check_branch
          %3045 = sbr.rel (%p3043) target = $region56
        $region55: #{tpu_custom_call.1} parent=47 // pred_region
          %s3047 = ssub.s32 4096, 4096
          %3048 = vsyncadd %s3039, %s3047
          %s3049 = smul.addr %s24, 32
          %s3050 = smul.addr %s3049, 128
          %s3051 = scalar_lea.hbm %s7, %s3050
          %s3052 = sshll.u32 %s3042, 4
          %s3053 = int_to_ptr.vmem [resolvable:$true] %s3052
          %3058 = dma.vmem_to_hbm [thread:$0]  %s3053, 4096, %s3051, %s3039, 128, 128, 8
        $region56: #{tpu_custom_call.1} parent=47 // pred_fallthru
          _
      $region48: #{tpu_custom_call.1} parent=5 // pred_fallthru
        _
      %p3059 = scmp.le.s32.totalorder 2, %s19
      // Predicated region
      $region57: #{tpu_custom_call.1} parent=5 // pred_check
        %p3060 = pneg %p3059
      $region58: #{tpu_custom_call.1} parent=5 // pred_check_branch
        %3062 = sbr.rel (%p3060) target = $region60
      $region59: #{tpu_custom_call.1} parent=5 // pred_region
        %s3063 = ssub.s32 %s19, 2
        // Predicated region
        $region61: #{tpu_custom_call.1} parent=59 // pred_check
          %p3064 = pneg %p200
        $region62: #{tpu_custom_call.1} parent=59 // pred_check_branch
          %3066 = sbr.rel (%p3064) target = $region64
        $region63: #{tpu_custom_call.1} parent=59 // pred_region
          %s3067 = sand.u32 %s185, 1
          %s3068 = scalar_lea.sflag [#allocation4], %s3067
          %s3069 = sand.u32 %s185, 1
          %s3070 = smul.addr %s3069, 256
          %s3071 = scalar_lea.vmem [#allocation5], %s3070
          %3072 = dma.done %s3068, 4096
        $region64: #{tpu_custom_call.1} parent=59 // pred_fallthru
          _
      $region60: #{tpu_custom_call.1} parent=5 // pred_fallthru
        _
    $region6: #{tpu_custom_call.1} parent=1 // loop_footer
      %s23 = sadd.s32 1, %s19
    $region7: #{tpu_custom_call.1} parent=1 // loop_footer_branch
      %18 = sbr.rel target = $region3
    $region8: #{tpu_custom_call.1} parent=1 // loop_exit
      _
    %3073 = vsyncpa [#allocation3], 1
    %s3074 = scalar_lea.sflag [#allocation3], 1
    %3075 = vsyncpa %s3074, 1
    %3076 = vsyncpa [#allocation4], 1
    %s3077 = scalar_lea.sflag [#allocation4], 1
    %3078 = vsyncpa %s3077, 1

</llo_original>
